<compile_context>
chip_gen: v7x
topology: tpu7x:2x2x1
jax: 0.10.0
libtpu: 0.0.40
codegen_flags: <defaults>
</compile_context>

<pallas_src>
import jax
import jax.numpy as jnp
from jax.experimental import pallas as pl
from jax.experimental.pallas import tpu as pltpu


def _round_up(x, m):
    return ((x + m - 1) // m) * m


def _choose_tb(B):
    """Batch tile: multiple of 16 sublanes at small batch; at large batch use
    up to 512 rows but keep >= 2 grid steps (megacore / v7x dual-TC)."""
    if B <= 256:
        return _round_up(B, 16)
    return min(512, _round_up(pl.cdiv(B, 2), 256))


def dnn_kernel(x_ref, w1_ref, b1_ref, w2_ref, b2_ref,
               w3_ref, b3_ref, w4_ref, b4_ref, o_ref):
    # Layer 1: cast the raw f32 activation tile to bf16 in-VMEM (no wrapper
    # pre-pass over x); bf16 [TB, 784] @ bf16 [784, 512] -> f32 acc.
    x = x_ref[...].astype(jnp.bfloat16)
    h = jnp.dot(x, w1_ref[...], preferred_element_type=jnp.float32)
    h = jnp.maximum(h + b1_ref[...], 0.0).astype(jnp.bfloat16)
    # Layer 2: [TB, 512] @ [512, 256]
    h = jnp.dot(h, w2_ref[...], preferred_element_type=jnp.float32)
    h = jnp.maximum(h + b2_ref[...], 0.0).astype(jnp.bfloat16)
    # Layer 3: [TB, 256] @ [256, 128]
    h = jnp.dot(h, w3_ref[...], preferred_element_type=jnp.float32)
    h = jnp.maximum(h + b3_ref[...], 0.0).astype(jnp.bfloat16)
    # Layer 4 (lane-padded logits, no activation): [TB, 128] @ [128, OUT_PAD]
    h = jnp.dot(h, w4_ref[...], preferred_element_type=jnp.float32)
    o_ref[...] = (h + b4_ref[...]).astype(o_ref.dtype)


def prepare_params(params):
    """One-time conversion of f32 [in_features, out_features] params to the
    kernel layout: bf16 weights, output lane-padded to a multiple of 128.
    Call once at init/load time -- NOT inside the per-step forward."""
    out_size = params["w4"].shape[1]
    out_pad = _round_up(max(out_size, 128), 128)
    return {
        "w1": params["w1"].astype(jnp.bfloat16),
        "w2": params["w2"].astype(jnp.bfloat16),
        "w3": params["w3"].astype(jnp.bfloat16),
        "w4": jnp.pad(params["w4"],
                      ((0, 0), (0, out_pad - out_size))).astype(jnp.bfloat16),
        # Biases stay f32: added on the f32 MXU accumulator.
        "b1": params["b1"],
        "b2": params["b2"],
        "b3": params["b3"],
        "b4": jnp.pad(params["b4"], ((0, 0), (0, out_pad - out_size))),
        "out_size": out_size,
    }


def dnn_forward(x_nchw, kparams):
    """x_nchw: [B, ...] float32 (flattened like xb.view(B, -1)).
    kparams: output of prepare_params() (kernel-layout weights)."""
    B = x_nchw.shape[0]
    x2d = x_nchw.reshape(B, -1).astype(jnp.float32)
    in_size = x2d.shape[1]

    w1, b1 = kparams["w1"], kparams["b1"]
    w2, b2 = kparams["w2"], kparams["b2"]
    w3, b3 = kparams["w3"], kparams["b3"]
    w4, b4 = kparams["w4"], kparams["b4"]
    out_size = kparams["out_size"]
    out_pad = w4.shape[1]

    # ---- batch tiling ----
    TB = _choose_tb(B)
    B_PAD = _round_up(B, TB)
    nb = B_PAD // TB
    if B_PAD != B:
        x2d = jnp.pad(x2d, ((0, B_PAD - B), (0, 0)))

    def const(shape):
        return pl.BlockSpec(shape, lambda i: tuple(0 for _ in shape))

    weight_bytes = sum(int(a.size) * a.dtype.itemsize
                       for a in (w1, w2, w3, w4, b1, b2, b3, b4))
    bytes_accessed = (weight_bytes
                      + int(x2d.size) * x2d.dtype.itemsize
                      + B_PAD * out_pad * 4)
    flops = 2 * B_PAD * (in_size * 512 + 512 * 256 + 256 * 128 + 128 * out_pad)

    out_padded = pl.pallas_call(
        dnn_kernel,
        out_shape=jax.ShapeDtypeStruct((B_PAD, out_pad), jnp.float32),
        grid=(nb,),
        in_specs=[
            # x: raw f32, last dim is the full array -> no 128 constraint.
            pl.BlockSpec((TB, in_size), lambda i: (i, 0)),
            const(w1.shape), const(b1.shape),
            const(w2.shape), const(b2.shape),
            const(w3.shape), const(b3.shape),
            const(w4.shape), const(b4.shape),
        ],
        out_specs=pl.BlockSpec((TB, out_pad), lambda i: (i, 0)),
        compiler_params=pltpu.CompilerParams(
            dimension_semantics=("parallel",),
            vmem_limit_bytes=16 << 20),
        cost_estimate=pl.CostEstimate(
            flops=flops, transcendentals=0, bytes_accessed=bytes_accessed),
    )(x2d, w1, b1, w2, b2, w3, b3, w4, b4)

    return out_padded[:B, :out_size]


def init_params(key, in_size, out_size):
    """Deterministic init mimicking torch.nn.Linear (uniform +-1/sqrt(fan_in)).
    Weights are stored [in, out] so the kernel computes x @ W + b."""
    dims = [(in_size, 512), (512, 256), (256, 128), (128, out_size)]
    params = {}
    for i, (fi, fo) in enumerate(dims, start=1):
        key, kw, kb = jax.random.split(key, 3)
        bound = 1.0 / (fi ** 0.5)
        params[f"w{i}"] = jax.random.uniform(
            kw, (fi, fo), jnp.float32, minval=-bound, maxval=bound)
        params[f"b{i}"] = jax.random.uniform(
            kb, (1, fo), jnp.float32, minval=-bound, maxval=bound)
    return params


if __name__ == "__main__":
    key = jax.random.PRNGKey(0)

    # Small MNIST-like setup: batch=8, 1x28x28 images, 10 classes.
    B, C, H, W = 8, 1, 28, 28
    in_size = C * H * W      # 784
    out_size = 10

    key, kx = jax.random.split(key)
    x = jax.random.normal(kx, (B, C, H, W), dtype=jnp.float32)

    params = init_params(key, in_size, out_size)
    kparams = prepare_params(params)          # one-time layout conversion

    logits = dnn_forward(x, kparams)
    jax.block_until_ready(logits)

    # Pure-JAX reference emulating the kernel's bf16-in / f32-accumulate math.
    def ref(x):
        def bf16(a):
            return a.astype(jnp.bfloat16).astype(jnp.float32)

        h = bf16(x.reshape(B, -1))
        h = jnp.maximum(h @ bf16(params["w1"]) + params["b1"], 0.0)
        h = bf16(h)
        h = jnp.maximum(h @ bf16(params["w2"]) + params["b2"], 0.0)
        h = bf16(h)
        h = jnp.maximum(h @ bf16(params["w3"]) + params["b3"], 0.0)
        h = bf16(h)
        return h @ bf16(params["w4"]) + params["b4"]

    assert logits.shape == (B, out_size)
    assert jnp.allclose(logits, ref(x), atol=1e-2, rtol=1e-2)
    print("KERNEL_OK")
</pallas_src>

<mosaic_0001>
module attributes {stable_mosaic.version = 11 : i64} {
  func.func @dnn_kernel(%arg0: i32, %arg1: memref<16x784xf32, #tpu.memory_space<vmem>>, %arg2: memref<784x512xbf16, #tpu.memory_space<vmem>>, %arg3: memref<1x512xf32, #tpu.memory_space<vmem>>, %arg4: memref<512x256xbf16, #tpu.memory_space<vmem>>, %arg5: memref<1x256xf32, #tpu.memory_space<vmem>>, %arg6: memref<256x128xbf16, #tpu.memory_space<vmem>>, %arg7: memref<1x128xf32, #tpu.memory_space<vmem>>, %arg8: memref<128x128xbf16, #tpu.memory_space<vmem>>, %arg9: memref<1x128xf32, #tpu.memory_space<vmem>>, %arg10: memref<16x128xf32, #tpu.memory_space<vmem>>) attributes {dimension_semantics = [#tpu.dimension_semantics<parallel>], iteration_bounds = array<i64: 1>, scalar_prefetch = 0 : i64, scratch_operands = 0 : i64, tpu.core_type = #tpu.core_type<tc>, window_params = [{transform_indices = @transform_0, window_bounds = array<i64: 16, 784>}, {pipeline_mode = #tpu.pipeline_mode<synchronous>, transform_indices = @transform_1, window_bounds = array<i64: 784, 512>}, {pipeline_mode = #tpu.pipeline_mode<synchronous>, transform_indices = @transform_2, window_bounds = array<i64: 1, 512>}, {pipeline_mode = #tpu.pipeline_mode<synchronous>, transform_indices = @transform_3, window_bounds = array<i64: 512, 256>}, {pipeline_mode = #tpu.pipeline_mode<synchronous>, transform_indices = @transform_4, window_bounds = array<i64: 1, 256>}, {pipeline_mode = #tpu.pipeline_mode<synchronous>, transform_indices = @transform_5, window_bounds = array<i64: 256, 128>}, {pipeline_mode = #tpu.pipeline_mode<synchronous>, transform_indices = @transform_6, window_bounds = array<i64: 1, 128>}, {pipeline_mode = #tpu.pipeline_mode<synchronous>, transform_indices = @transform_7, window_bounds = array<i64: 128, 128>}, {pipeline_mode = #tpu.pipeline_mode<synchronous>, transform_indices = @transform_8, window_bounds = array<i64: 1, 128>}, {transform_indices = @transform_9, window_bounds = array<i64: 16, 128>}]} {
    %c0 = arith.constant 0 : index
    %c0_0 = arith.constant 0 : index
    %0 = vector.load %arg1[%c0, %c0_0] : memref<16x784xf32, #tpu.memory_space<vmem>>, vector<16x784xf32>
    %1 = arith.truncf %0 : vector<16x784xf32> to vector<16x784xbf16>
    %c0_1 = arith.constant 0 : index
    %c0_2 = arith.constant 0 : index
    %2 = vector.load %arg2[%c0_1, %c0_2] : memref<784x512xbf16, #tpu.memory_space<vmem>>, vector<784x512xbf16>
    %cst = arith.constant dense<0.000000e+00> : vector<16x512xf32>
    %3 = tpu.matmul %1, %2, %cst {dimension_numbers = #tpu.dot_dimension_numbers<[1], [0], [0], [1], [0, 0, 1, 1], [], []>} : vector<16x784xbf16>, vector<784x512xbf16>, vector<16x512xf32> -> vector<16x512xf32>
    %c0_3 = arith.constant 0 : index
    %c0_4 = arith.constant 0 : index
    %4 = vector.load %arg3[%c0_3, %c0_4] : memref<1x512xf32, #tpu.memory_space<vmem>>, vector<1x512xf32>
    %5 = vector.broadcast %4 : vector<1x512xf32> to vector<16x512xf32>
    %6 = arith.addf %3, %5 : vector<16x512xf32>
    %cst_5 = arith.constant 0.000000e+00 : f32
    %7 = vector.broadcast %cst_5 : f32 to vector<16x512xf32>
    %8 = arith.maximumf %6, %7 : vector<16x512xf32>
    %9 = arith.truncf %8 : vector<16x512xf32> to vector<16x512xbf16>
    %c0_6 = arith.constant 0 : index
    %c0_7 = arith.constant 0 : index
    %10 = vector.load %arg4[%c0_6, %c0_7] : memref<512x256xbf16, #tpu.memory_space<vmem>>, vector<512x256xbf16>
    %cst_8 = arith.constant dense<0.000000e+00> : vector<16x256xf32>
    %11 = tpu.matmul %9, %10, %cst_8 {dimension_numbers = #tpu.dot_dimension_numbers<[1], [0], [0], [1], [0, 0, 1, 1], [], []>} : vector<16x512xbf16>, vector<512x256xbf16>, vector<16x256xf32> -> vector<16x256xf32>
    %c0_9 = arith.constant 0 : index
    %c0_10 = arith.constant 0 : index
    %12 = vector.load %arg5[%c0_9, %c0_10] : memref<1x256xf32, #tpu.memory_space<vmem>>, vector<1x256xf32>
    %13 = vector.broadcast %12 : vector<1x256xf32> to vector<16x256xf32>
    %14 = arith.addf %11, %13 : vector<16x256xf32>
    %cst_11 = arith.constant 0.000000e+00 : f32
    %15 = vector.broadcast %cst_11 : f32 to vector<16x256xf32>
    %16 = arith.maximumf %14, %15 : vector<16x256xf32>
    %17 = arith.truncf %16 : vector<16x256xf32> to vector<16x256xbf16>
    %c0_12 = arith.constant 0 : index
    %c0_13 = arith.constant 0 : index
    %18 = vector.load %arg6[%c0_12, %c0_13] : memref<256x128xbf16, #tpu.memory_space<vmem>>, vector<256x128xbf16>
    %cst_14 = arith.constant dense<0.000000e+00> : vector<16x128xf32>
    %19 = tpu.matmul %17, %18, %cst_14 {dimension_numbers = #tpu.dot_dimension_numbers<[1], [0], [0], [1], [0, 0, 1, 1], [], []>} : vector<16x256xbf16>, vector<256x128xbf16>, vector<16x128xf32> -> vector<16x128xf32>
    %c0_15 = arith.constant 0 : index
    %c0_16 = arith.constant 0 : index
    %20 = vector.load %arg7[%c0_15, %c0_16] : memref<1x128xf32, #tpu.memory_space<vmem>>, vector<1x128xf32>
    %21 = vector.broadcast %20 : vector<1x128xf32> to vector<16x128xf32>
    %22 = arith.addf %19, %21 : vector<16x128xf32>
    %cst_17 = arith.constant 0.000000e+00 : f32
    %23 = vector.broadcast %cst_17 : f32 to vector<16x128xf32>
    %24 = arith.maximumf %22, %23 : vector<16x128xf32>
    %25 = arith.truncf %24 : vector<16x128xf32> to vector<16x128xbf16>
    %c0_18 = arith.constant 0 : index
    %c0_19 = arith.constant 0 : index
    %26 = vector.load %arg8[%c0_18, %c0_19] : memref<128x128xbf16, #tpu.memory_space<vmem>>, vector<128x128xbf16>
    %cst_20 = arith.constant dense<0.000000e+00> : vector<16x128xf32>
    %27 = tpu.matmul %25, %26, %cst_20 {dimension_numbers = #tpu.dot_dimension_numbers<[1], [0], [0], [1], [0, 0, 1, 1], [], []>} : vector<16x128xbf16>, vector<128x128xbf16>, vector<16x128xf32> -> vector<16x128xf32>
    %c0_21 = arith.constant 0 : index
    %c0_22 = arith.constant 0 : index
    %28 = vector.load %arg9[%c0_21, %c0_22] : memref<1x128xf32, #tpu.memory_space<vmem>>, vector<1x128xf32>
    %29 = vector.broadcast %28 : vector<1x128xf32> to vector<16x128xf32>
    %30 = arith.addf %27, %29 : vector<16x128xf32>
    %c0_23 = arith.constant 0 : index
    %c0_24 = arith.constant 0 : index
    %31 = vector.load %arg10[%c0_23, %c0_24] : memref<16x128xf32, #tpu.memory_space<vmem>>, vector<16x128xf32>
    tpu.vector_store %arg10[%c0_23, %c0_24], %30 {strides = array<i32>} : memref<16x128xf32, #tpu.memory_space<vmem>>, vector<16x128xf32>,
    return
  }
  func.func @transform_0(%arg0: i32) -> (i32, i32) {
    %c0_i32 = arith.constant 0 : i32
    %c0_i32_0 = arith.constant 0 : i32
    return %arg0, %c0_i32 : i32, i32
  }
  func.func @transform_1(%arg0: i32) -> (i32, i32) {
    %c0_i32 = arith.constant 0 : i32
    %c0_i32_0 = arith.constant 0 : i32
    %c0_i32_1 = arith.constant 0 : i32
    return %c0_i32, %c0_i32_0 : i32, i32
  }
  func.func @transform_2(%arg0: i32) -> (i32, i32) {
    %c0_i32 = arith.constant 0 : i32
    %c0_i32_0 = arith.constant 0 : i32
    %c0_i32_1 = arith.constant 0 : i32
    return %c0_i32, %c0_i32_0 : i32, i32
  }
  func.func @transform_3(%arg0: i32) -> (i32, i32) {
    %c0_i32 = arith.constant 0 : i32
    %c0_i32_0 = arith.constant 0 : i32
    %c0_i32_1 = arith.constant 0 : i32
    return %c0_i32, %c0_i32_0 : i32, i32
  }
  func.func @transform_4(%arg0: i32) -> (i32, i32) {
    %c0_i32 = arith.constant 0 : i32
    %c0_i32_0 = arith.constant 0 : i32
    %c0_i32_1 = arith.constant 0 : i32
    return %c0_i32, %c0_i32_0 : i32, i32
  }
  func.func @transform_5(%arg0: i32) -> (i32, i32) {
    %c0_i32 = arith.constant 0 : i32
    %c0_i32_0 = arith.constant 0 : i32
    %c0_i32_1 = arith.constant 0 : i32
    return %c0_i32, %c0_i32_0 : i32, i32
  }
  func.func @transform_6(%arg0: i32) -> (i32, i32) {
    %c0_i32 = arith.constant 0 : i32
    %c0_i32_0 = arith.constant 0 : i32
    %c0_i32_1 = arith.constant 0 : i32
    return %c0_i32, %c0_i32_0 : i32, i32
  }
  func.func @transform_7(%arg0: i32) -> (i32, i32) {
    %c0_i32 = arith.constant 0 : i32
    %c0_i32_0 = arith.constant 0 : i32
    %c0_i32_1 = arith.constant 0 : i32
    return %c0_i32, %c0_i32_0 : i32, i32
  }
  func.func @transform_8(%arg0: i32) -> (i32, i32) {
    %c0_i32 = arith.constant 0 : i32
    %c0_i32_0 = arith.constant 0 : i32
    %c0_i32_1 = arith.constant 0 : i32
    return %c0_i32, %c0_i32_0 : i32, i32
  }
  func.func @transform_9(%arg0: i32) -> (i32, i32) {
    %c0_i32 = arith.constant 0 : i32
    %c0_i32_0 = arith.constant 0 : i32
    return %arg0, %c0_i32 : i32, i32
  }
}

</mosaic_0001>

<llo_original>
// kernel: tpu_custom_call.1
$region0: #{tpu_custom_call.1}
  #allocation0 [shape = 'u32[]', space=smem, size = 0x4, offset = 0x4, fixed_abs, tag = 'smem constant byte address 0x4 - core index']
  #allocation1 [shape = 'u32[144,128]{1,0:T(1,128)}', space=vmem, size = 0x12000, scoped, tag = 'internal scratch']
  %s0 = inlined_call_operand.hbm [shape: f32[16,784], index: 0, kind: input, shape index: {}]
  %s1 = inlined_call_operand.hbm [shape: bf16[784,512], index: 1, kind: input, shape index: {}]
  %s2 = inlined_call_operand.vmem [shape: f32[1,512], index: 2, kind: input, shape index: {}]
  %s3 = inlined_call_operand.hbm [shape: bf16[512,256], index: 3, kind: input, shape index: {}]
  %s4 = inlined_call_operand.vmem [shape: f32[1,256], index: 4, kind: input, shape index: {}]
  %s5 = inlined_call_operand.hbm [shape: bf16[256,128], index: 5, kind: input, shape index: {}]
  %s6 = inlined_call_operand.vmem [shape: f32[1,128], index: 6, kind: input, shape index: {}]
  %s7 = inlined_call_operand.hbm [shape: bf16[128,128], index: 7, kind: input, shape index: {}]
  %s8 = inlined_call_operand.vmem [shape: f32[1,128], index: 8, kind: input, shape index: {}]
  %s9 = inlined_call_operand.hbm [shape: f32[16,128], index: 9, kind: output, shape index: {}]
  %s10 = sld [smem:[#allocation0]]
  $region66: #{tpu_custom_call.1} parent=0
    _
  %s12 = ssub.s32 1, %s10
  %s13 = scalar_select 0, %s12, %s10
  $region1: #{tpu_custom_call.1} parent=0
    #allocation2 [shape = 'u8[57344]{0}', space=vmem, size = 0xe000, scoped, tag = 'input window, operand 0, single buffered']
    #allocation3 [shape = 's32[1]{0}', space=sflag, size = 0x4, scoped, tag = 'scoped memory for tpu_custom_call.1']
    #allocation4 [shape = 's32[1]{0}', space=sflag, size = 0x4, scoped, tag = 'scoped memory for tpu_custom_call.1']
    #allocation5 [shape = 'u8[802816]{0}', space=vmem, size = 0xc4000, scoped, tag = 'input window, operand 1, single buffered']
    #allocation6 [shape = 's32[1]{0}', space=sflag, size = 0x4, scoped, tag = 'scoped memory for tpu_custom_call.1']
    #allocation7 [shape = 'u8[262144]{0}', space=vmem, size = 0x40000, scoped, tag = 'input window, operand 3, single buffered']
    #allocation8 [shape = 'u8[65536]{0}', space=vmem, size = 0x10000, scoped, tag = 'input window, operand 5, single buffered']
    #allocation9 [shape = 's32[1]{0}', space=sflag, size = 0x4, scoped, tag = 'scoped memory for tpu_custom_call.1']
    #allocation10 [shape = 'u8[32768]{0}', space=vmem, size = 0x8000, scoped, tag = 'input window, operand 7, single buffered']
    #allocation11 [shape = 'u8[8192]{0}', space=vmem, size = 0x2000, scoped, tag = 'output window, operand 0, single buffered']
    %14 = vsyncpa [#allocation3], 0
    %15 = vsyncpa [#allocation6], 0
    %16 = vsyncpa [#allocation9], 0
    %17 = vsyncpa [#allocation4], 0
    // Predicated region
    $region2: #{tpu_custom_call.1} parent=1 // pred_check
      _
    $region3: #{tpu_custom_call.1} parent=1 // pred_check_branch
      %19 = sbr.rel (0) target = $region5
    $region4: #{tpu_custom_call.1} parent=1 // pred_region
      %s21 = ssub.s32 1792, 1792
      %22 = vsyncadd [#allocation3], %s21
      %s23 = sshll.u32 [#allocation2], 4
      %s24 = int_to_ptr.vmem [resolvable:$true] %s23
      %29 = dma.hbm_to_vmem [thread:$0]  %s0, 1792, %s24, [#allocation3], 896, 896, 56
    $region5: #{tpu_custom_call.1} parent=1 // pred_fallthru
      _
    // Predicated region
    $region6: #{tpu_custom_call.1} parent=1 // pred_check
      _
    $region7: #{tpu_custom_call.1} parent=1 // pred_check_branch
      %31 = sbr.rel (0) target = $region9
    $region8: #{tpu_custom_call.1} parent=1 // pred_region
      %s33 = ssub.s32 25088, 25088
      %34 = vsyncadd [#allocation6], %s33
      %s35 = sshll.u32 [#allocation5], 4
      %s36 = int_to_ptr.vmem [resolvable:$true] %s35
      %41 = dma.hbm_to_vmem [thread:$0]  %s1, 25088, %s36, [#allocation6], 256, 256, 16
    $region9: #{tpu_custom_call.1} parent=1 // pred_fallthru
      _
    // Predicated region
    $region10: #{tpu_custom_call.1} parent=1 // pred_check
      _
    $region11: #{tpu_custom_call.1} parent=1 // pred_check_branch
      %43 = sbr.rel (0) target = $region13
    $region12: #{tpu_custom_call.1} parent=1 // pred_region
      _
    $region13: #{tpu_custom_call.1} parent=1 // pred_fallthru
      _
    // Predicated region
    $region14: #{tpu_custom_call.1} parent=1 // pred_check
      _
    $region15: #{tpu_custom_call.1} parent=1 // pred_check_branch
      %45 = sbr.rel (0) target = $region17
    $region16: #{tpu_custom_call.1} parent=1 // pred_region
      %s47 = ssub.s32 8192, 8192
      %48 = vsyncadd [#allocation6], %s47
      %s49 = sshll.u32 [#allocation7], 4
      %s50 = int_to_ptr.vmem [resolvable:$true] %s49
      %55 = dma.hbm_to_vmem [thread:$0]  %s3, 8192, %s50, [#allocation6], 128, 128, 8
    $region17: #{tpu_custom_call.1} parent=1 // pred_fallthru
      _
    // Predicated region
    $region18: #{tpu_custom_call.1} parent=1 // pred_check
      _
    $region19: #{tpu_custom_call.1} parent=1 // pred_check_branch
      %57 = sbr.rel (0) target = $region21
    $region20: #{tpu_custom_call.1} parent=1 // pred_region
      _
    $region21: #{tpu_custom_call.1} parent=1 // pred_fallthru
      _
    // Predicated region
    $region22: #{tpu_custom_call.1} parent=1 // pred_check
      _
    $region23: #{tpu_custom_call.1} parent=1 // pred_check_branch
      %59 = sbr.rel (0) target = $region25
    $region24: #{tpu_custom_call.1} parent=1 // pred_region
      %s61 = ssub.s32 2048, 2048
      %62 = vsyncadd [#allocation9], %s61
      %s63 = sshll.u32 [#allocation8], 4
      %s64 = int_to_ptr.vmem [resolvable:$true] %s63
      %69 = dma.hbm_to_vmem [thread:$0]  %s5, 2048, %s64, [#allocation9], 64, 64, 4
    $region25: #{tpu_custom_call.1} parent=1 // pred_fallthru
      _
    // Predicated region
    $region26: #{tpu_custom_call.1} parent=1 // pred_check
      _
    $region27: #{tpu_custom_call.1} parent=1 // pred_check_branch
      %71 = sbr.rel (0) target = $region29
    $region28: #{tpu_custom_call.1} parent=1 // pred_region
      _
    $region29: #{tpu_custom_call.1} parent=1 // pred_fallthru
      _
    // Predicated region
    $region30: #{tpu_custom_call.1} parent=1 // pred_check
      _
    $region31: #{tpu_custom_call.1} parent=1 // pred_check_branch
      %73 = sbr.rel (0) target = $region33
    $region32: #{tpu_custom_call.1} parent=1 // pred_region
      %s75 = ssub.s32 1024, 1024
      %76 = vsyncadd [#allocation9], %s75
      %s77 = sshll.u32 [#allocation10], 4
      %s78 = int_to_ptr.vmem [resolvable:$true] %s77
      %83 = dma.hbm_to_vmem [thread:$0]  %s7, 1024, %s78, [#allocation9], 64, 64, 4
    $region33: #{tpu_custom_call.1} parent=1 // pred_fallthru
      _
    // Predicated region
    $region34: #{tpu_custom_call.1} parent=1 // pred_check
      _
    $region35: #{tpu_custom_call.1} parent=1 // pred_check_branch
      %85 = sbr.rel (0) target = $region37
    $region36: #{tpu_custom_call.1} parent=1 // pred_region
      _
    $region37: #{tpu_custom_call.1} parent=1 // pred_fallthru
      _
    // Predicated region
    $region38: #{tpu_custom_call.1} parent=1 // pred_check
      _
    $region39: #{tpu_custom_call.1} parent=1 // pred_check_branch
      %87 = sbr.rel (0) target = $region41
    $region40: #{tpu_custom_call.1} parent=1 // pred_region
      %88 = dma.done [#allocation3], 1792
    $region41: #{tpu_custom_call.1} parent=1 // pred_fallthru
      _
    // Predicated region
    $region42: #{tpu_custom_call.1} parent=1 // pred_check
      _
    $region43: #{tpu_custom_call.1} parent=1 // pred_check_branch
      %90 = sbr.rel (0) target = $region45
    $region44: #{tpu_custom_call.1} parent=1 // pred_region
      %91 = dma.done [#allocation6], 25088
    $region45: #{tpu_custom_call.1} parent=1 // pred_fallthru
      _
    // Predicated region
    $region46: #{tpu_custom_call.1} parent=1 // pred_check
      _
    $region47: #{tpu_custom_call.1} parent=1 // pred_check_branch
      %93 = sbr.rel (0) target = $region49
    $region48: #{tpu_custom_call.1} parent=1 // pred_region
      %94 = dma.done [#allocation6], 8192
    $region49: #{tpu_custom_call.1} parent=1 // pred_fallthru
      _
    // Predicated region
    $region50: #{tpu_custom_call.1} parent=1 // pred_check
      _
    $region51: #{tpu_custom_call.1} parent=1 // pred_check_branch
      %96 = sbr.rel (0) target = $region53
    $region52: #{tpu_custom_call.1} parent=1 // pred_region
      %97 = dma.done [#allocation9], 2048
    $region53: #{tpu_custom_call.1} parent=1 // pred_fallthru
      _
    // Predicated region
    $region54: #{tpu_custom_call.1} parent=1 // pred_check
      _
    $region55: #{tpu_custom_call.1} parent=1 // pred_check_branch
      %99 = sbr.rel (0) target = $region57
    $region56: #{tpu_custom_call.1} parent=1 // pred_region
      %100 = dma.done [#allocation9], 1024
    $region57: #{tpu_custom_call.1} parent=1 // pred_fallthru
      _
    %v102 = vld [vmem:[#allocation2] sm:$0xff]
    %v103 = vld [vmem:[#allocation2 + $0x8] sm:$0xff]
    %v104 = vld [vmem:[#allocation2 + $0x10] sm:$0xff]
    %v105 = vld [vmem:[#allocation2 + $0x18] sm:$0xff]
    %v106 = vld [vmem:[#allocation2 + $0x20] sm:$0xff]
    %v107 = vld [vmem:[#allocation2 + $0x28] sm:$0xff]
    %v108 = vld [vmem:[#allocation2 + $0x30] sm:$0xff]
    %v109 = vld [vmem:[#allocation2 + $0x38] sm:$0xff]
    %v110 = vld [vmem:[#allocation2 + $0x40] sm:$0xff]
    %v111 = vld [vmem:[#allocation2 + $0x48] sm:$0xff]
    %v112 = vld [vmem:[#allocation2 + $0x50] sm:$0xff]
    %v113 = vld [vmem:[#allocation2 + $0x58] sm:$0xff]
    %v114 = vld [vmem:[#allocation2 + $0x60] sm:$0xff]
    %v115 = vld [vmem:[#allocation2 + $0x68] sm:$0xff]
    %v116 = vpack.c.bf16 %v109, %v102
    %v117 = vpack.c.bf16 %v110, %v103
    %v118 = vpack.c.bf16 %v111, %v104
    %v119 = vpack.c.bf16 %v112, %v105
    %v120 = vpack.c.bf16 %v113, %v106
    %v121 = vpack.c.bf16 %v114, %v107
    %v122 = vpack.c.bf16 %v115, %v108
    %v123 = vld [vmem:[#allocation5] sm:$0xff]
    %v124 = vld [vmem:[#allocation5 + $0x8] sm:$0xff]
    %v125 = vld [vmem:[#allocation5 + $0x10] sm:$0xff]
    %v126 = vld [vmem:[#allocation5 + $0x18] sm:$0xff]
    %v127 = vld [vmem:[#allocation5 + $0x20] sm:$0xff]
    %v128 = vld [vmem:[#allocation5 + $0x28] sm:$0xff]
    %v129 = vld [vmem:[#allocation5 + $0x30] sm:$0xff]
    %v130 = vld [vmem:[#allocation5 + $0x38] sm:$0xff]
    %v131 = vld [vmem:[#allocation5 + $0x40] sm:$0xff]
    %v132 = vld [vmem:[#allocation5 + $0x48] sm:$0xff]
    %v133 = vld [vmem:[#allocation5 + $0x50] sm:$0xff]
    %v134 = vld [vmem:[#allocation5 + $0x58] sm:$0xff]
    %v135 = vld [vmem:[#allocation5 + $0x60] sm:$0xff]
    %v136 = vld [vmem:[#allocation5 + $0x68] sm:$0xff]
    %v137 = vld [vmem:[#allocation5 + $0x70] sm:$0xff]
    %v138 = vld [vmem:[#allocation5 + $0x78] sm:$0xff]
    %v139 = vld [vmem:[#allocation5 + $0x80] sm:$0xff]
    %v140 = vld [vmem:[#allocation5 + $0x88] sm:$0xff]
    %v141 = vld [vmem:[#allocation5 + $0x90] sm:$0xff]
    %v142 = vld [vmem:[#allocation5 + $0x98] sm:$0xff]
    %v143 = vld [vmem:[#allocation5 + $0xa0] sm:$0xff]
    %v144 = vld [vmem:[#allocation5 + $0xa8] sm:$0xff]
    %v145 = vld [vmem:[#allocation5 + $0xb0] sm:$0xff]
    %v146 = vld [vmem:[#allocation5 + $0xb8] sm:$0xff]
    %v147 = vld [vmem:[#allocation5 + $0xc0] sm:$0xff]
    %v148 = vld [vmem:[#allocation5 + $0xc8] sm:$0xff]
    %v149 = vld [vmem:[#allocation5 + $0xd0] sm:$0xff]
    %v150 = vld [vmem:[#allocation5 + $0xd8] sm:$0xff]
    %v151 = vld [vmem:[#allocation5 + $0xe0] sm:$0xff]
    %v152 = vld [vmem:[#allocation5 + $0xe8] sm:$0xff]
    %v153 = vld [vmem:[#allocation5 + $0xf0] sm:$0xff]
    %v154 = vld [vmem:[#allocation5 + $0xf8] sm:$0xff]
    %v155 = vld [vmem:[#allocation5 + $0x100] sm:$0xff]
    %v156 = vld [vmem:[#allocation5 + $0x108] sm:$0xff]
    %v157 = vld [vmem:[#allocation5 + $0x110] sm:$0xff]
    %v158 = vld [vmem:[#allocation5 + $0x118] sm:$0xff]
    %v159 = vld [vmem:[#allocation5 + $0x120] sm:$0xff]
    %v160 = vld [vmem:[#allocation5 + $0x128] sm:$0xff]
    %v161 = vld [vmem:[#allocation5 + $0x130] sm:$0xff]
    %v162 = vld [vmem:[#allocation5 + $0x138] sm:$0xff]
    %v163 = vld [vmem:[#allocation5 + $0x140] sm:$0xff]
    %v164 = vld [vmem:[#allocation5 + $0x148] sm:$0xff]
    %v165 = vld [vmem:[#allocation5 + $0x150] sm:$0xff]
    %v166 = vld [vmem:[#allocation5 + $0x158] sm:$0xff]
    %v167 = vld [vmem:[#allocation5 + $0x160] sm:$0xff]
    %v168 = vld [vmem:[#allocation5 + $0x168] sm:$0xff]
    %v169 = vld [vmem:[#allocation5 + $0x170] sm:$0xff]
    %v170 = vld [vmem:[#allocation5 + $0x178] sm:$0xff]
    %v171 = vld [vmem:[#allocation5 + $0x180] sm:$0xff]
    %v172 = vld [vmem:[#allocation5 + $0x188] sm:$0xff]
    %v173 = vld [vmem:[#allocation5 + $0x190] sm:$0xff]
    %v174 = vld [vmem:[#allocation5 + $0x198] sm:$0xff]
    %v175 = vld [vmem:[#allocation5 + $0x1a0] sm:$0xff]
    %v176 = vld [vmem:[#allocation5 + $0x1a8] sm:$0xff]
    %v177 = vld [vmem:[#allocation5 + $0x1b0] sm:$0xff]
    %v178 = vld [vmem:[#allocation5 + $0x1b8] sm:$0xff]
    %v179 = vld [vmem:[#allocation5 + $0x1c0] sm:$0xff]
    %v180 = vld [vmem:[#allocation5 + $0x1c8] sm:$0xff]
    %v181 = vld [vmem:[#allocation5 + $0x1d0] sm:$0xff]
    %v182 = vld [vmem:[#allocation5 + $0x1d8] sm:$0xff]
    %v183 = vld [vmem:[#allocation5 + $0x1e0] sm:$0xff]
    %v184 = vld [vmem:[#allocation5 + $0x1e8] sm:$0xff]
    %v185 = vld [vmem:[#allocation5 + $0x1f0] sm:$0xff]
    %v186 = vld [vmem:[#allocation5 + $0x1f8] sm:$0xff]
    %v187 = vld [vmem:[#allocation5 + $0x200] sm:$0xff]
    %v188 = vld [vmem:[#allocation5 + $0x208] sm:$0xff]
    %v189 = vld [vmem:[#allocation5 + $0x210] sm:$0xff]
    %v190 = vld [vmem:[#allocation5 + $0x218] sm:$0xff]
    %v191 = vld [vmem:[#allocation5 + $0x220] sm:$0xff]
    %v192 = vld [vmem:[#allocation5 + $0x228] sm:$0xff]
    %v193 = vld [vmem:[#allocation5 + $0x230] sm:$0xff]
    %v194 = vld [vmem:[#allocation5 + $0x238] sm:$0xff]
    %v195 = vld [vmem:[#allocation5 + $0x240] sm:$0xff]
    %v196 = vld [vmem:[#allocation5 + $0x248] sm:$0xff]
    %v197 = vld [vmem:[#allocation5 + $0x250] sm:$0xff]
    %v198 = vld [vmem:[#allocation5 + $0x258] sm:$0xff]
    %v199 = vld [vmem:[#allocation5 + $0x260] sm:$0xff]
    %v200 = vld [vmem:[#allocation5 + $0x268] sm:$0xff]
    %v201 = vld [vmem:[#allocation5 + $0x270] sm:$0xff]
    %v202 = vld [vmem:[#allocation5 + $0x278] sm:$0xff]
    %v203 = vld [vmem:[#allocation5 + $0x280] sm:$0xff]
    %v204 = vld [vmem:[#allocation5 + $0x288] sm:$0xff]
    %v205 = vld [vmem:[#allocation5 + $0x290] sm:$0xff]
    %v206 = vld [vmem:[#allocation5 + $0x298] sm:$0xff]
    %v207 = vld [vmem:[#allocation5 + $0x2a0] sm:$0xff]
    %v208 = vld [vmem:[#allocation5 + $0x2a8] sm:$0xff]
    %v209 = vld [vmem:[#allocation5 + $0x2b0] sm:$0xff]
    %v210 = vld [vmem:[#allocation5 + $0x2b8] sm:$0xff]
    %v211 = vld [vmem:[#allocation5 + $0x2c0] sm:$0xff]
    %v212 = vld [vmem:[#allocation5 + $0x2c8] sm:$0xff]
    %v213 = vld [vmem:[#allocation5 + $0x2d0] sm:$0xff]
    %v214 = vld [vmem:[#allocation5 + $0x2d8] sm:$0xff]
    %v215 = vld [vmem:[#allocation5 + $0x2e0] sm:$0xff]
    %v216 = vld [vmem:[#allocation5 + $0x2e8] sm:$0xff]
    %v217 = vld [vmem:[#allocation5 + $0x2f0] sm:$0xff]
    %v218 = vld [vmem:[#allocation5 + $0x2f8] sm:$0xff]
    %v219 = vld [vmem:[#allocation5 + $0x300] sm:$0xff]
    %v220 = vld [vmem:[#allocation5 + $0x308] sm:$0xff]
    %v221 = vld [vmem:[#allocation5 + $0x310] sm:$0xff]
    %v222 = vld [vmem:[#allocation5 + $0x318] sm:$0xff]
    %v223 = vld [vmem:[#allocation5 + $0x320] sm:$0xff]
    %v224 = vld [vmem:[#allocation5 + $0x328] sm:$0xff]
    %v225 = vld [vmem:[#allocation5 + $0x330] sm:$0xff]
    %v226 = vld [vmem:[#allocation5 + $0x338] sm:$0xff]
    %v227 = vld [vmem:[#allocation5 + $0x340] sm:$0xff]
    %v228 = vld [vmem:[#allocation5 + $0x348] sm:$0xff]
    %v229 = vld [vmem:[#allocation5 + $0x350] sm:$0xff]
    %v230 = vld [vmem:[#allocation5 + $0x358] sm:$0xff]
    %v231 = vld [vmem:[#allocation5 + $0x360] sm:$0xff]
    %v232 = vld [vmem:[#allocation5 + $0x368] sm:$0xff]
    %v233 = vld [vmem:[#allocation5 + $0x370] sm:$0xff]
    %v234 = vld [vmem:[#allocation5 + $0x378] sm:$0xff]
    %v235 = vld [vmem:[#allocation5 + $0x380] sm:$0xff]
    %v236 = vld [vmem:[#allocation5 + $0x388] sm:$0xff]
    %v237 = vld [vmem:[#allocation5 + $0x390] sm:$0xff]
    %v238 = vld [vmem:[#allocation5 + $0x398] sm:$0xff]
    %v239 = vld [vmem:[#allocation5 + $0x3a0] sm:$0xff]
    %v240 = vld [vmem:[#allocation5 + $0x3a8] sm:$0xff]
    %v241 = vld [vmem:[#allocation5 + $0x3b0] sm:$0xff]
    %v242 = vld [vmem:[#allocation5 + $0x3b8] sm:$0xff]
    %v243 = vld [vmem:[#allocation5 + $0x3c0] sm:$0xff]
    %v244 = vld [vmem:[#allocation5 + $0x3c8] sm:$0xff]
    %v245 = vld [vmem:[#allocation5 + $0x3d0] sm:$0xff]
    %v246 = vld [vmem:[#allocation5 + $0x3d8] sm:$0xff]
    %v247 = vld [vmem:[#allocation5 + $0x3e0] sm:$0xff]
    %v248 = vld [vmem:[#allocation5 + $0x3e8] sm:$0xff]
    %v249 = vld [vmem:[#allocation5 + $0x3f0] sm:$0xff]
    %v250 = vld [vmem:[#allocation5 + $0x3f8] sm:$0xff]
    %v251 = vld [vmem:[#allocation5 + $0x400] sm:$0xff]
    %v252 = vld [vmem:[#allocation5 + $0x408] sm:$0xff]
    %v253 = vld [vmem:[#allocation5 + $0x410] sm:$0xff]
    %v254 = vld [vmem:[#allocation5 + $0x418] sm:$0xff]
    %v255 = vld [vmem:[#allocation5 + $0x420] sm:$0xff]
    %v256 = vld [vmem:[#allocation5 + $0x428] sm:$0xff]
    %v257 = vld [vmem:[#allocation5 + $0x430] sm:$0xff]
    %v258 = vld [vmem:[#allocation5 + $0x438] sm:$0xff]
    %v259 = vld [vmem:[#allocation5 + $0x440] sm:$0xff]
    %v260 = vld [vmem:[#allocation5 + $0x448] sm:$0xff]
    %v261 = vld [vmem:[#allocation5 + $0x450] sm:$0xff]
    %v262 = vld [vmem:[#allocation5 + $0x458] sm:$0xff]
    %v263 = vld [vmem:[#allocation5 + $0x460] sm:$0xff]
    %v264 = vld [vmem:[#allocation5 + $0x468] sm:$0xff]
    %v265 = vld [vmem:[#allocation5 + $0x470] sm:$0xff]
    %v266 = vld [vmem:[#allocation5 + $0x478] sm:$0xff]
    %v267 = vld [vmem:[#allocation5 + $0x480] sm:$0xff]
    %v268 = vld [vmem:[#allocation5 + $0x488] sm:$0xff]
    %v269 = vld [vmem:[#allocation5 + $0x490] sm:$0xff]
    %v270 = vld [vmem:[#allocation5 + $0x498] sm:$0xff]
    %v271 = vld [vmem:[#allocation5 + $0x4a0] sm:$0xff]
    %v272 = vld [vmem:[#allocation5 + $0x4a8] sm:$0xff]
    %v273 = vld [vmem:[#allocation5 + $0x4b0] sm:$0xff]
    %v274 = vld [vmem:[#allocation5 + $0x4b8] sm:$0xff]
    %v275 = vld [vmem:[#allocation5 + $0x4c0] sm:$0xff]
    %v276 = vld [vmem:[#allocation5 + $0x4c8] sm:$0xff]
    %v277 = vld [vmem:[#allocation5 + $0x4d0] sm:$0xff]
    %v278 = vld [vmem:[#allocation5 + $0x4d8] sm:$0xff]
    %v279 = vld [vmem:[#allocation5 + $0x4e0] sm:$0xff]
    %v280 = vld [vmem:[#allocation5 + $0x4e8] sm:$0xff]
    %v281 = vld [vmem:[#allocation5 + $0x4f0] sm:$0xff]
    %v282 = vld [vmem:[#allocation5 + $0x4f8] sm:$0xff]
    %v283 = vld [vmem:[#allocation5 + $0x500] sm:$0xff]
    %v284 = vld [vmem:[#allocation5 + $0x508] sm:$0xff]
    %v285 = vld [vmem:[#allocation5 + $0x510] sm:$0xff]
    %v286 = vld [vmem:[#allocation5 + $0x518] sm:$0xff]
    %v287 = vld [vmem:[#allocation5 + $0x520] sm:$0xff]
    %v288 = vld [vmem:[#allocation5 + $0x528] sm:$0xff]
    %v289 = vld [vmem:[#allocation5 + $0x530] sm:$0xff]
    %v290 = vld [vmem:[#allocation5 + $0x538] sm:$0xff]
    %v291 = vld [vmem:[#allocation5 + $0x540] sm:$0xff]
    %v292 = vld [vmem:[#allocation5 + $0x548] sm:$0xff]
    %v293 = vld [vmem:[#allocation5 + $0x550] sm:$0xff]
    %v294 = vld [vmem:[#allocation5 + $0x558] sm:$0xff]
    %v295 = vld [vmem:[#allocation5 + $0x560] sm:$0xff]
    %v296 = vld [vmem:[#allocation5 + $0x568] sm:$0xff]
    %v297 = vld [vmem:[#allocation5 + $0x570] sm:$0xff]
    %v298 = vld [vmem:[#allocation5 + $0x578] sm:$0xff]
    %v299 = vld [vmem:[#allocation5 + $0x580] sm:$0xff]
    %v300 = vld [vmem:[#allocation5 + $0x588] sm:$0xff]
    %v301 = vld [vmem:[#allocation5 + $0x590] sm:$0xff]
    %v302 = vld [vmem:[#allocation5 + $0x598] sm:$0xff]
    %v303 = vld [vmem:[#allocation5 + $0x5a0] sm:$0xff]
    %v304 = vld [vmem:[#allocation5 + $0x5a8] sm:$0xff]
    %v305 = vld [vmem:[#allocation5 + $0x5b0] sm:$0xff]
    %v306 = vld [vmem:[#allocation5 + $0x5b8] sm:$0xff]
    %v307 = vld [vmem:[#allocation5 + $0x5c0] sm:$0xff]
    %v308 = vld [vmem:[#allocation5 + $0x5c8] sm:$0xff]
    %v309 = vld [vmem:[#allocation5 + $0x5d0] sm:$0xff]
    %v310 = vld [vmem:[#allocation5 + $0x5d8] sm:$0xff]
    %v311 = vld [vmem:[#allocation5 + $0x5e0] sm:$0xff]
    %v312 = vld [vmem:[#allocation5 + $0x5e8] sm:$0xff]
    %v313 = vld [vmem:[#allocation5 + $0x5f0] sm:$0xff]
    %v314 = vld [vmem:[#allocation5 + $0x5f8] sm:$0xff]
    %v315 = vld [vmem:[#allocation5 + $0x600] sm:$0xff]
    %v316 = vld [vmem:[#allocation5 + $0x608] sm:$0xff]
    %v317 = vld [vmem:[#allocation5 + $0x610] sm:$0xff]
    %v318 = vld [vmem:[#allocation5 + $0x618] sm:$0xff]
    %v319 = vld [vmem:[%s2] sm:$0xf]
    %v321 = vlaneseq
    %v322 = vshrl.u32 %v321, 7
    %v323 = vsub.s32 0, %v322
    %v324 = vrot.slane %v319, %v323
    %v325 = vlaneseq
    %v326 = vshrl.u32 %v325, 7
    %v327 = vsub.s32 1, %v326
    %v328 = vrot.slane %v319, %v327
    %v329 = vlaneseq
    %v330 = vshrl.u32 %v329, 7
    %v331 = vsub.s32 2, %v330
    %v332 = vrot.slane %v319, %v331
    %v333 = vlaneseq
    %v334 = vshrl.u32 %v333, 7
    %v335 = vsub.s32 3, %v334
    %v336 = vrot.slane %v319, %v335
    %v537 = vunpack.c.l.b16 %v123
    %v538 = vunpack.c.h.b16 %v123
    %v539 = vunpack.c.l.b16 %v124
    %v540 = vunpack.c.h.b16 %v124
    %v541 = vunpack.c.l.b16 %v125
    %v542 = vunpack.c.h.b16 %v125
    %v543 = vunpack.c.l.b16 %v126
    %v544 = vunpack.c.h.b16 %v126
    %v545 = vunpack.c.l.b16 %v127
    %v546 = vunpack.c.h.b16 %v127
    %v547 = vunpack.c.l.b16 %v128
    %v548 = vunpack.c.h.b16 %v128
    %v549 = vunpack.c.l.b16 %v129
    %v550 = vunpack.c.h.b16 %v129
    %v551 = vunpack.c.l.b16 %v130
    %v552 = vunpack.c.h.b16 %v130
    %v553 = vunpack.c.l.b16 %v131
    %v554 = vunpack.c.h.b16 %v131
    %v555 = vunpack.c.l.b16 %v132
    %v556 = vunpack.c.h.b16 %v132
    %v557 = vunpack.c.l.b16 %v133
    %v558 = vunpack.c.h.b16 %v133
    %v559 = vunpack.c.l.b16 %v134
    %v560 = vunpack.c.h.b16 %v134
    %v561 = vunpack.c.l.b16 %v135
    %v562 = vunpack.c.h.b16 %v135
    %v563 = vunpack.c.l.b16 %v136
    %v564 = vunpack.c.h.b16 %v136
    %v565 = vunpack.c.l.b16 %v137
    %v566 = vunpack.c.h.b16 %v137
    %v567 = vunpack.c.l.b16 %v138
    %v568 = vunpack.c.h.b16 %v138
    %v569 = vunpack.c.l.b16 %v139
    %v570 = vunpack.c.h.b16 %v139
    %v571 = vunpack.c.l.b16 %v140
    %v572 = vunpack.c.h.b16 %v140
    %v573 = vunpack.c.l.b16 %v141
    %v574 = vunpack.c.h.b16 %v141
    %v575 = vunpack.c.l.b16 %v142
    %v576 = vunpack.c.h.b16 %v142
    %v577 = vunpack.c.l.b16 %v143
    %v578 = vunpack.c.h.b16 %v143
    %v579 = vunpack.c.l.b16 %v144
    %v580 = vunpack.c.h.b16 %v144
    %v581 = vunpack.c.l.b16 %v145
    %v582 = vunpack.c.h.b16 %v145
    %v583 = vunpack.c.l.b16 %v146
    %v584 = vunpack.c.h.b16 %v146
    %v585 = vunpack.c.l.b16 %v147
    %v586 = vunpack.c.h.b16 %v147
    %v587 = vunpack.c.l.b16 %v148
    %v588 = vunpack.c.h.b16 %v148
    %v589 = vunpack.c.l.b16 %v149
    %v590 = vunpack.c.h.b16 %v149
    %v591 = vunpack.c.l.b16 %v150
    %v592 = vunpack.c.h.b16 %v150
    %v593 = vunpack.c.l.b16 %v151
    %v594 = vunpack.c.h.b16 %v151
    %v595 = vunpack.c.l.b16 %v152
    %v596 = vunpack.c.h.b16 %v152
    %v597 = vunpack.c.l.b16 %v153
    %v598 = vunpack.c.h.b16 %v153
    %v599 = vunpack.c.l.b16 %v154
    %v600 = vunpack.c.h.b16 %v154
    %v601 = vunpack.c.l.b16 %v155
    %v602 = vunpack.c.h.b16 %v155
    %v603 = vunpack.c.l.b16 %v156
    %v604 = vunpack.c.h.b16 %v156
    %v605 = vunpack.c.l.b16 %v157
    %v606 = vunpack.c.h.b16 %v157
    %v607 = vunpack.c.l.b16 %v158
    %v608 = vunpack.c.h.b16 %v158
    %v609 = vunpack.c.l.b16 %v159
    %v610 = vunpack.c.h.b16 %v159
    %v611 = vunpack.c.l.b16 %v160
    %v612 = vunpack.c.h.b16 %v160
    %v613 = vunpack.c.l.b16 %v161
    %v614 = vunpack.c.h.b16 %v161
    %v615 = vunpack.c.l.b16 %v162
    %v616 = vunpack.c.h.b16 %v162
    %v617 = vunpack.c.l.b16 %v163
    %v618 = vunpack.c.h.b16 %v163
    %v619 = vunpack.c.l.b16 %v164
    %v620 = vunpack.c.h.b16 %v164
    %v621 = vunpack.c.l.b16 %v165
    %v622 = vunpack.c.h.b16 %v165
    %v623 = vunpack.c.l.b16 %v166
    %v624 = vunpack.c.h.b16 %v166
    %v625 = vunpack.c.l.b16 %v167
    %v626 = vunpack.c.h.b16 %v167
    %v627 = vunpack.c.l.b16 %v168
    %v628 = vunpack.c.h.b16 %v168
    %v629 = vunpack.c.l.b16 %v169
    %v630 = vunpack.c.h.b16 %v169
    %v631 = vunpack.c.l.b16 %v170
    %v632 = vunpack.c.h.b16 %v170
    %v633 = vunpack.c.l.b16 %v171
    %v634 = vunpack.c.h.b16 %v171
    %v635 = vunpack.c.l.b16 %v172
    %v636 = vunpack.c.h.b16 %v172
    %v637 = vunpack.c.l.b16 %v173
    %v638 = vunpack.c.h.b16 %v173
    %v639 = vunpack.c.l.b16 %v174
    %v640 = vunpack.c.h.b16 %v174
    %v641 = vunpack.c.l.b16 %v175
    %v642 = vunpack.c.h.b16 %v175
    %v643 = vunpack.c.l.b16 %v176
    %v644 = vunpack.c.h.b16 %v176
    %v645 = vunpack.c.l.b16 %v177
    %v646 = vunpack.c.h.b16 %v177
    %v647 = vunpack.c.l.b16 %v178
    %v648 = vunpack.c.h.b16 %v178
    %v649 = vunpack.c.l.b16 %v179
    %v650 = vunpack.c.h.b16 %v179
    %v651 = vunpack.c.l.b16 %v180
    %v652 = vunpack.c.h.b16 %v180
    %v653 = vunpack.c.l.b16 %v181
    %v654 = vunpack.c.h.b16 %v181
    %v655 = vunpack.c.l.b16 %v182
    %v656 = vunpack.c.h.b16 %v182
    %v657 = vunpack.c.l.b16 %v183
    %v658 = vunpack.c.h.b16 %v183
    %v659 = vunpack.c.l.b16 %v184
    %v660 = vunpack.c.h.b16 %v184
    %v661 = vunpack.c.l.b16 %v185
    %v662 = vunpack.c.h.b16 %v185
    %v663 = vunpack.c.l.b16 %v186
    %v664 = vunpack.c.h.b16 %v186
    %v665 = vunpack.c.l.b16 %v187
    %v666 = vunpack.c.h.b16 %v187
    %v667 = vunpack.c.l.b16 %v188
    %v668 = vunpack.c.h.b16 %v188
    %v669 = vunpack.c.l.b16 %v189
    %v670 = vunpack.c.h.b16 %v189
    %v671 = vunpack.c.l.b16 %v190
    %v672 = vunpack.c.h.b16 %v190
    %v673 = vunpack.c.l.b16 %v191
    %v674 = vunpack.c.h.b16 %v191
    %v675 = vunpack.c.l.b16 %v192
    %v676 = vunpack.c.h.b16 %v192
    %v677 = vunpack.c.l.b16 %v193
    %v678 = vunpack.c.h.b16 %v193
    %v679 = vunpack.c.l.b16 %v194
    %v680 = vunpack.c.h.b16 %v194
    %v681 = vunpack.c.l.b16 %v195
    %v682 = vunpack.c.h.b16 %v195
    %v683 = vunpack.c.l.b16 %v196
    %v684 = vunpack.c.h.b16 %v196
    %v685 = vunpack.c.l.b16 %v197
    %v686 = vunpack.c.h.b16 %v197
    %v687 = vunpack.c.l.b16 %v198
    %v688 = vunpack.c.h.b16 %v198
    %v689 = vunpack.c.l.b16 %v199
    %v690 = vunpack.c.h.b16 %v199
    %v691 = vunpack.c.l.b16 %v200
    %v692 = vunpack.c.h.b16 %v200
    %v693 = vunpack.c.l.b16 %v201
    %v694 = vunpack.c.h.b16 %v201
    %v695 = vunpack.c.l.b16 %v202
    %v696 = vunpack.c.h.b16 %v202
    %v697 = vunpack.c.l.b16 %v203
    %v698 = vunpack.c.h.b16 %v203
    %v699 = vunpack.c.l.b16 %v204
    %v700 = vunpack.c.h.b16 %v204
    %v701 = vunpack.c.l.b16 %v205
    %v702 = vunpack.c.h.b16 %v205
    %v703 = vunpack.c.l.b16 %v206
    %v704 = vunpack.c.h.b16 %v206
    %v705 = vunpack.c.l.b16 %v207
    %v706 = vunpack.c.h.b16 %v207
    %v707 = vunpack.c.l.b16 %v208
    %v708 = vunpack.c.h.b16 %v208
    %v709 = vunpack.c.l.b16 %v209
    %v710 = vunpack.c.h.b16 %v209
    %v711 = vunpack.c.l.b16 %v210
    %v712 = vunpack.c.h.b16 %v210
    %v713 = vunpack.c.l.b16 %v211
    %v714 = vunpack.c.h.b16 %v211
    %v715 = vunpack.c.l.b16 %v212
    %v716 = vunpack.c.h.b16 %v212
    %v717 = vunpack.c.l.b16 %v213
    %v718 = vunpack.c.h.b16 %v213
    %v719 = vunpack.c.l.b16 %v214
    %v720 = vunpack.c.h.b16 %v214
    %v721 = vunpack.c.l.b16 %v215
    %v722 = vunpack.c.h.b16 %v215
    %v723 = vunpack.c.l.b16 %v216
    %v724 = vunpack.c.h.b16 %v216
    %v725 = vunpack.c.l.b16 %v217
    %v726 = vunpack.c.h.b16 %v217
    %v727 = vunpack.c.l.b16 %v218
    %v728 = vunpack.c.h.b16 %v218
    %v729 = vunpack.c.l.b16 %v219
    %v730 = vunpack.c.h.b16 %v219
    %v731 = vunpack.c.l.b16 %v220
    %v732 = vunpack.c.h.b16 %v220
    %v733 = vunpack.c.l.b16 %v221
    %v734 = vunpack.c.h.b16 %v221
    %v735 = vunpack.c.l.b16 %v222
    %v736 = vunpack.c.h.b16 %v222
    %v737 = vunpack.c.l.b16 %v223
    %v738 = vunpack.c.h.b16 %v223
    %v739 = vunpack.c.l.b16 %v224
    %v740 = vunpack.c.h.b16 %v224
    %v741 = vunpack.c.l.b16 %v225
    %v742 = vunpack.c.h.b16 %v225
    %v743 = vunpack.c.l.b16 %v226
    %v744 = vunpack.c.h.b16 %v226
    %v745 = vunpack.c.l.b16 %v227
    %v746 = vunpack.c.h.b16 %v227
    %v747 = vunpack.c.l.b16 %v228
    %v748 = vunpack.c.h.b16 %v228
    %v749 = vunpack.c.l.b16 %v229
    %v750 = vunpack.c.h.b16 %v229
    %v751 = vunpack.c.l.b16 %v230
    %v752 = vunpack.c.h.b16 %v230
    %v753 = vunpack.c.l.b16 %v231
    %v754 = vunpack.c.h.b16 %v231
    %v755 = vunpack.c.l.b16 %v232
    %v756 = vunpack.c.h.b16 %v232
    %v757 = vunpack.c.l.b16 %v233
    %v758 = vunpack.c.h.b16 %v233
    %v759 = vunpack.c.l.b16 %v234
    %v760 = vunpack.c.h.b16 %v234
    %v761 = vunpack.c.l.b16 %v235
    %v762 = vunpack.c.h.b16 %v235
    %v763 = vunpack.c.l.b16 %v236
    %v764 = vunpack.c.h.b16 %v236
    %v765 = vunpack.c.l.b16 %v237
    %v766 = vunpack.c.h.b16 %v237
    %v767 = vunpack.c.l.b16 %v238
    %v768 = vunpack.c.h.b16 %v238
    %v769 = vunpack.c.l.b16 %v239
    %v770 = vunpack.c.h.b16 %v239
    %v771 = vunpack.c.l.b16 %v240
    %v772 = vunpack.c.h.b16 %v240
    %v773 = vunpack.c.l.b16 %v241
    %v774 = vunpack.c.h.b16 %v241
    %v775 = vunpack.c.l.b16 %v242
    %v776 = vunpack.c.h.b16 %v242
    %v777 = vunpack.c.l.b16 %v243
    %v778 = vunpack.c.h.b16 %v243
    %v779 = vunpack.c.l.b16 %v244
    %v780 = vunpack.c.h.b16 %v244
    %v781 = vunpack.c.l.b16 %v245
    %v782 = vunpack.c.h.b16 %v245
    %v783 = vunpack.c.l.b16 %v246
    %v784 = vunpack.c.h.b16 %v246
    %v785 = vunpack.c.l.b16 %v247
    %v786 = vunpack.c.h.b16 %v247
    %v787 = vunpack.c.l.b16 %v248
    %v788 = vunpack.c.h.b16 %v248
    %v789 = vunpack.c.l.b16 %v249
    %v790 = vunpack.c.h.b16 %v249
    %v791 = vunpack.c.l.b16 %v250
    %v792 = vunpack.c.h.b16 %v250
    %v793 = vunpack.c.l.b16 %v251
    %v794 = vunpack.c.h.b16 %v251
    %v795 = vunpack.c.l.b16 %v252
    %v796 = vunpack.c.h.b16 %v252
    %v797 = vunpack.c.l.b16 %v253
    %v798 = vunpack.c.h.b16 %v253
    %v799 = vunpack.c.l.b16 %v254
    %v800 = vunpack.c.h.b16 %v254
    %v801 = vunpack.c.l.b16 %v255
    %v802 = vunpack.c.h.b16 %v255
    %v803 = vunpack.c.l.b16 %v256
    %v804 = vunpack.c.h.b16 %v256
    %v805 = vunpack.c.l.b16 %v257
    %v806 = vunpack.c.h.b16 %v257
    %v807 = vunpack.c.l.b16 %v258
    %v808 = vunpack.c.h.b16 %v258
    %v809 = vunpack.c.l.b16 %v259
    %v810 = vunpack.c.h.b16 %v259
    %v811 = vunpack.c.l.b16 %v260
    %v812 = vunpack.c.h.b16 %v260
    %v813 = vunpack.c.l.b16 %v261
    %v814 = vunpack.c.h.b16 %v261
    %v815 = vunpack.c.l.b16 %v262
    %v816 = vunpack.c.h.b16 %v262
    %v817 = vunpack.c.l.b16 %v263
    %v818 = vunpack.c.h.b16 %v263
    %v819 = vunpack.c.l.b16 %v264
    %v820 = vunpack.c.h.b16 %v264
    %v821 = vunpack.c.l.b16 %v265
    %v822 = vunpack.c.h.b16 %v265
    %v823 = vunpack.c.l.b16 %v266
    %v824 = vunpack.c.h.b16 %v266
    %v825 = vunpack.c.l.b16 %v267
    %v826 = vunpack.c.h.b16 %v267
    %v827 = vunpack.c.l.b16 %v268
    %v828 = vunpack.c.h.b16 %v268
    %v829 = vunpack.c.l.b16 %v269
    %v830 = vunpack.c.h.b16 %v269
    %v831 = vunpack.c.l.b16 %v270
    %v832 = vunpack.c.h.b16 %v270
    %v833 = vunpack.c.l.b16 %v271
    %v834 = vunpack.c.h.b16 %v271
    %v835 = vunpack.c.l.b16 %v272
    %v836 = vunpack.c.h.b16 %v272
    %v837 = vunpack.c.l.b16 %v273
    %v838 = vunpack.c.h.b16 %v273
    %v839 = vunpack.c.l.b16 %v274
    %v840 = vunpack.c.h.b16 %v274
    %v841 = vunpack.c.l.b16 %v275
    %v842 = vunpack.c.h.b16 %v275
    %v843 = vunpack.c.l.b16 %v276
    %v844 = vunpack.c.h.b16 %v276
    %v845 = vunpack.c.l.b16 %v277
    %v846 = vunpack.c.h.b16 %v277
    %v847 = vunpack.c.l.b16 %v278
    %v848 = vunpack.c.h.b16 %v278
    %v849 = vunpack.c.l.b16 %v279
    %v850 = vunpack.c.h.b16 %v279
    %v851 = vunpack.c.l.b16 %v280
    %v852 = vunpack.c.h.b16 %v280
    %v853 = vunpack.c.l.b16 %v281
    %v854 = vunpack.c.h.b16 %v281
    %v855 = vunpack.c.l.b16 %v282
    %v856 = vunpack.c.h.b16 %v282
    %v857 = vunpack.c.l.b16 %v283
    %v858 = vunpack.c.h.b16 %v283
    %v859 = vunpack.c.l.b16 %v284
    %v860 = vunpack.c.h.b16 %v284
    %v861 = vunpack.c.l.b16 %v285
    %v862 = vunpack.c.h.b16 %v285
    %v863 = vunpack.c.l.b16 %v286
    %v864 = vunpack.c.h.b16 %v286
    %v865 = vunpack.c.l.b16 %v287
    %v866 = vunpack.c.h.b16 %v287
    %v867 = vunpack.c.l.b16 %v288
    %v868 = vunpack.c.h.b16 %v288
    %v869 = vunpack.c.l.b16 %v289
    %v870 = vunpack.c.h.b16 %v289
    %v871 = vunpack.c.l.b16 %v290
    %v872 = vunpack.c.h.b16 %v290
    %v873 = vunpack.c.l.b16 %v291
    %v874 = vunpack.c.h.b16 %v291
    %v875 = vunpack.c.l.b16 %v292
    %v876 = vunpack.c.h.b16 %v292
    %v877 = vunpack.c.l.b16 %v293
    %v878 = vunpack.c.h.b16 %v293
    %v879 = vunpack.c.l.b16 %v294
    %v880 = vunpack.c.h.b16 %v294
    %v881 = vunpack.c.l.b16 %v295
    %v882 = vunpack.c.h.b16 %v295
    %v883 = vunpack.c.l.b16 %v296
    %v884 = vunpack.c.h.b16 %v296
    %v885 = vunpack.c.l.b16 %v297
    %v886 = vunpack.c.h.b16 %v297
    %v887 = vunpack.c.l.b16 %v298
    %v888 = vunpack.c.h.b16 %v298
    %v889 = vunpack.c.l.b16 %v299
    %v890 = vunpack.c.h.b16 %v299
    %v891 = vunpack.c.l.b16 %v300
    %v892 = vunpack.c.h.b16 %v300
    %v893 = vunpack.c.l.b16 %v301
    %v894 = vunpack.c.h.b16 %v301
    %v895 = vunpack.c.l.b16 %v302
    %v896 = vunpack.c.h.b16 %v302
    %v897 = vunpack.c.l.b16 %v303
    %v898 = vunpack.c.h.b16 %v303
    %v899 = vunpack.c.l.b16 %v304
    %v900 = vunpack.c.h.b16 %v304
    %v901 = vunpack.c.l.b16 %v305
    %v902 = vunpack.c.h.b16 %v305
    %v903 = vunpack.c.l.b16 %v306
    %v904 = vunpack.c.h.b16 %v306
    %v905 = vunpack.c.l.b16 %v307
    %v906 = vunpack.c.h.b16 %v307
    %v907 = vunpack.c.l.b16 %v308
    %v908 = vunpack.c.h.b16 %v308
    %v909 = vunpack.c.l.b16 %v309
    %v910 = vunpack.c.h.b16 %v309
    %v911 = vunpack.c.l.b16 %v310
    %v912 = vunpack.c.h.b16 %v310
    %v913 = vunpack.c.l.b16 %v311
    %v914 = vunpack.c.h.b16 %v311
    %v915 = vunpack.c.l.b16 %v312
    %v916 = vunpack.c.h.b16 %v312
    %v917 = vunpack.c.l.b16 %v313
    %v918 = vunpack.c.h.b16 %v313
    %v919 = vunpack.c.l.b16 %v314
    %v920 = vunpack.c.h.b16 %v314
    %v921 = vunpack.c.l.b16 %v315
    %v922 = vunpack.c.h.b16 %v315
    %v923 = vunpack.c.l.b16 %v316
    %v924 = vunpack.c.h.b16 %v316
    %v925 = vunpack.c.l.b16 %v317
    %v926 = vunpack.c.h.b16 %v317
    %v927 = vunpack.c.l.b16 %v318
    %v928 = vunpack.c.h.b16 %v318
    %v929 = vpack.c.b16 %v541, %v537
    %v930 = vpack.c.b16 %v542, %v538
    %v931 = vpack.c.b16 %v543, %v539
    %v932 = vpack.c.b16 %v544, %v540
    %v933 = vpack.c.b16 %v549, %v545
    %v934 = vpack.c.b16 %v550, %v546
    %v935 = vpack.c.b16 %v551, %v547
    %v936 = vpack.c.b16 %v552, %v548
    %v937 = vpack.c.b16 %v557, %v553
    %v938 = vpack.c.b16 %v558, %v554
    %v939 = vpack.c.b16 %v559, %v555
    %v940 = vpack.c.b16 %v560, %v556
    %v941 = vpack.c.b16 %v565, %v561
    %v942 = vpack.c.b16 %v566, %v562
    %v943 = vpack.c.b16 %v567, %v563
    %v944 = vpack.c.b16 %v568, %v564
    %v945 = vpack.c.b16 %v573, %v569
    %v946 = vpack.c.b16 %v574, %v570
    %v947 = vpack.c.b16 %v575, %v571
    %v948 = vpack.c.b16 %v576, %v572
    %v949 = vpack.c.b16 %v581, %v577
    %v950 = vpack.c.b16 %v582, %v578
    %v951 = vpack.c.b16 %v583, %v579
    %v952 = vpack.c.b16 %v584, %v580
    %v953 = vpack.c.b16 %v589, %v585
    %v954 = vpack.c.b16 %v590, %v586
    %v955 = vpack.c.b16 %v591, %v587
    %v956 = vpack.c.b16 %v592, %v588
    %v957 = vpack.c.b16 %v597, %v593
    %v958 = vpack.c.b16 %v598, %v594
    %v959 = vpack.c.b16 %v599, %v595
    %v960 = vpack.c.b16 %v600, %v596
    %v961 = vpack.c.b16 %v605, %v601
    %v962 = vpack.c.b16 %v606, %v602
    %v963 = vpack.c.b16 %v607, %v603
    %v964 = vpack.c.b16 %v608, %v604
    %v965 = vpack.c.b16 %v613, %v609
    %v966 = vpack.c.b16 %v614, %v610
    %v967 = vpack.c.b16 %v615, %v611
    %v968 = vpack.c.b16 %v616, %v612
    %v969 = vpack.c.b16 %v621, %v617
    %v970 = vpack.c.b16 %v622, %v618
    %v971 = vpack.c.b16 %v623, %v619
    %v972 = vpack.c.b16 %v624, %v620
    %v973 = vpack.c.b16 %v629, %v625
    %v974 = vpack.c.b16 %v630, %v626
    %v975 = vpack.c.b16 %v631, %v627
    %v976 = vpack.c.b16 %v632, %v628
    %v977 = vpack.c.b16 %v637, %v633
    %v978 = vpack.c.b16 %v638, %v634
    %v979 = vpack.c.b16 %v639, %v635
    %v980 = vpack.c.b16 %v640, %v636
    %v981 = vpack.c.b16 %v645, %v641
    %v982 = vpack.c.b16 %v646, %v642
    %v983 = vpack.c.b16 %v647, %v643
    %v984 = vpack.c.b16 %v648, %v644
    %v985 = vpack.c.b16 %v653, %v649
    %v986 = vpack.c.b16 %v654, %v650
    %v987 = vpack.c.b16 %v655, %v651
    %v988 = vpack.c.b16 %v656, %v652
    %v989 = vpack.c.b16 %v661, %v657
    %v990 = vpack.c.b16 %v662, %v658
    %v991 = vpack.c.b16 %v663, %v659
    %v992 = vpack.c.b16 %v664, %v660
    %v993 = vpack.c.b16 %v669, %v665
    %v994 = vpack.c.b16 %v670, %v666
    %v995 = vpack.c.b16 %v671, %v667
    %v996 = vpack.c.b16 %v672, %v668
    %v997 = vpack.c.b16 %v677, %v673
    %v998 = vpack.c.b16 %v678, %v674
    %v999 = vpack.c.b16 %v679, %v675
    %v1000 = vpack.c.b16 %v680, %v676
    %v1001 = vpack.c.b16 %v685, %v681
    %v1002 = vpack.c.b16 %v686, %v682
    %v1003 = vpack.c.b16 %v687, %v683
    %v1004 = vpack.c.b16 %v688, %v684
    %v1005 = vpack.c.b16 %v693, %v689
    %v1006 = vpack.c.b16 %v694, %v690
    %v1007 = vpack.c.b16 %v695, %v691
    %v1008 = vpack.c.b16 %v696, %v692
    %v1009 = vpack.c.b16 %v701, %v697
    %v1010 = vpack.c.b16 %v702, %v698
    %v1011 = vpack.c.b16 %v703, %v699
    %v1012 = vpack.c.b16 %v704, %v700
    %v1013 = vpack.c.b16 %v709, %v705
    %v1014 = vpack.c.b16 %v710, %v706
    %v1015 = vpack.c.b16 %v711, %v707
    %v1016 = vpack.c.b16 %v712, %v708
    %v1017 = vpack.c.b16 %v717, %v713
    %v1018 = vpack.c.b16 %v718, %v714
    %v1019 = vpack.c.b16 %v719, %v715
    %v1020 = vpack.c.b16 %v720, %v716
    %v1021 = vpack.c.b16 %v725, %v721
    %v1022 = vpack.c.b16 %v726, %v722
    %v1023 = vpack.c.b16 %v727, %v723
    %v1024 = vpack.c.b16 %v728, %v724
    %v1025 = vpack.c.b16 %v733, %v729
    %v1026 = vpack.c.b16 %v734, %v730
    %v1027 = vpack.c.b16 %v735, %v731
    %v1028 = vpack.c.b16 %v736, %v732
    %v1029 = vpack.c.b16 %v741, %v737
    %v1030 = vpack.c.b16 %v742, %v738
    %v1031 = vpack.c.b16 %v743, %v739
    %v1032 = vpack.c.b16 %v744, %v740
    %v1033 = vpack.c.b16 %v749, %v745
    %v1034 = vpack.c.b16 %v750, %v746
    %v1035 = vpack.c.b16 %v751, %v747
    %v1036 = vpack.c.b16 %v752, %v748
    %v1037 = vpack.c.b16 %v757, %v753
    %v1038 = vpack.c.b16 %v758, %v754
    %v1039 = vpack.c.b16 %v759, %v755
    %v1040 = vpack.c.b16 %v760, %v756
    %v1041 = vpack.c.b16 %v765, %v761
    %v1042 = vpack.c.b16 %v766, %v762
    %v1043 = vpack.c.b16 %v767, %v763
    %v1044 = vpack.c.b16 %v768, %v764
    %v1045 = vpack.c.b16 %v773, %v769
    %v1046 = vpack.c.b16 %v774, %v770
    %v1047 = vpack.c.b16 %v775, %v771
    %v1048 = vpack.c.b16 %v776, %v772
    %v1049 = vpack.c.b16 %v781, %v777
    %v1050 = vpack.c.b16 %v782, %v778
    %v1051 = vpack.c.b16 %v783, %v779
    %v1052 = vpack.c.b16 %v784, %v780
    %v1053 = vpack.c.b16 %v789, %v785
    %v1054 = vpack.c.b16 %v790, %v786
    %v1055 = vpack.c.b16 %v791, %v787
    %v1056 = vpack.c.b16 %v792, %v788
    %v1057 = vpack.c.b16 %v797, %v793
    %v1058 = vpack.c.b16 %v798, %v794
    %v1059 = vpack.c.b16 %v799, %v795
    %v1060 = vpack.c.b16 %v800, %v796
    %v1061 = vpack.c.b16 %v805, %v801
    %v1062 = vpack.c.b16 %v806, %v802
    %v1063 = vpack.c.b16 %v807, %v803
    %v1064 = vpack.c.b16 %v808, %v804
    %v1065 = vpack.c.b16 %v813, %v809
    %v1066 = vpack.c.b16 %v814, %v810
    %v1067 = vpack.c.b16 %v815, %v811
    %v1068 = vpack.c.b16 %v816, %v812
    %v1069 = vpack.c.b16 %v821, %v817
    %v1070 = vpack.c.b16 %v822, %v818
    %v1071 = vpack.c.b16 %v823, %v819
    %v1072 = vpack.c.b16 %v824, %v820
    %v1073 = vpack.c.b16 %v829, %v825
    %v1074 = vpack.c.b16 %v830, %v826
    %v1075 = vpack.c.b16 %v831, %v827
    %v1076 = vpack.c.b16 %v832, %v828
    %v1077 = vpack.c.b16 %v837, %v833
    %v1078 = vpack.c.b16 %v838, %v834
    %v1079 = vpack.c.b16 %v839, %v835
    %v1080 = vpack.c.b16 %v840, %v836
    %v1081 = vpack.c.b16 %v845, %v841
    %v1082 = vpack.c.b16 %v846, %v842
    %v1083 = vpack.c.b16 %v847, %v843
    %v1084 = vpack.c.b16 %v848, %v844
    %v1085 = vpack.c.b16 %v853, %v849
    %v1086 = vpack.c.b16 %v854, %v850
    %v1087 = vpack.c.b16 %v855, %v851
    %v1088 = vpack.c.b16 %v856, %v852
    %v1089 = vpack.c.b16 %v861, %v857
    %v1090 = vpack.c.b16 %v862, %v858
    %v1091 = vpack.c.b16 %v863, %v859
    %v1092 = vpack.c.b16 %v864, %v860
    %v1093 = vpack.c.b16 %v869, %v865
    %v1094 = vpack.c.b16 %v870, %v866
    %v1095 = vpack.c.b16 %v871, %v867
    %v1096 = vpack.c.b16 %v872, %v868
    %v1097 = vpack.c.b16 %v877, %v873
    %v1098 = vpack.c.b16 %v878, %v874
    %v1099 = vpack.c.b16 %v879, %v875
    %v1100 = vpack.c.b16 %v880, %v876
    %v1101 = vpack.c.b16 %v885, %v881
    %v1102 = vpack.c.b16 %v886, %v882
    %v1103 = vpack.c.b16 %v887, %v883
    %v1104 = vpack.c.b16 %v888, %v884
    %v1105 = vpack.c.b16 %v893, %v889
    %v1106 = vpack.c.b16 %v894, %v890
    %v1107 = vpack.c.b16 %v895, %v891
    %v1108 = vpack.c.b16 %v896, %v892
    %v1109 = vpack.c.b16 %v901, %v897
    %v1110 = vpack.c.b16 %v902, %v898
    %v1111 = vpack.c.b16 %v903, %v899
    %v1112 = vpack.c.b16 %v904, %v900
    %v1113 = vpack.c.b16 %v909, %v905
    %v1114 = vpack.c.b16 %v910, %v906
    %v1115 = vpack.c.b16 %v911, %v907
    %v1116 = vpack.c.b16 %v912, %v908
    %v1117 = vpack.c.b16 %v917, %v913
    %v1118 = vpack.c.b16 %v918, %v914
    %v1119 = vpack.c.b16 %v919, %v915
    %v1120 = vpack.c.b16 %v920, %v916
    %v1121 = vpack.c.b16 %v925, %v921
    %v1122 = vpack.c.b16 %v926, %v922
    %v1123 = vpack.c.b16 %v927, %v923
    %v1124 = vpack.c.b16 %v928, %v924
    %vm1321 = vcmask 130048
    %v1323 = vsel %vm1321, %v122, 0
    %1325 = vmatprep.subr.bf16.mxu0 %v930
    %1326 = vmatpush1.bf16.msra.mxu0 %v929
    %1327 = vmatprep.subr.bf16.mxu0 %v934
    %1328 = vmatpush1.bf16.msra.mxu0 %v933
    %1329 = vmatprep.subr.bf16.mxu0 %v938
    %1330 = vmatpush1.bf16.msra.mxu0 %v937
    %1331 = vmatprep.subr.bf16.mxu0 %v942
    %1332 = vmatpush1.bf16.msra.mxu0 %v941
    %1333 = vmatprep.subr.bf16.mxu0 %v946
    %1334 = vmatpush1.bf16.msra.mxu0 %v945
    %1335 = vmatprep.subr.bf16.mxu0 %v950
    %1336 = vmatpush1.bf16.msra.mxu0 %v949
    %1337 = vmatprep.subr.bf16.mxu0 %v954
    %1338 = vmatpush1.bf16.msra.mxu0 %v953
    %1339 = vmatprep.subr.bf16.mxu0 %v958
    %1340 = vmatpush1.bf16.msra.mxu0 %v957
    %1341 = vmatprep.subr.bf16.mxu0 %v962
    %1342 = vmatpush1.bf16.msra.mxu0 %v961
    %1343 = vmatprep.subr.bf16.mxu0 %v966
    %1344 = vmatpush1.bf16.msra.mxu0 %v965
    %1345 = vmatprep.subr.bf16.mxu0 %v970
    %1346 = vmatpush1.bf16.msra.mxu0 %v969
    %1347 = vmatprep.subr.bf16.mxu0 %v974
    %1348 = vmatpush1.bf16.msra.mxu0 %v973
    %1349 = vmatprep.subr.bf16.mxu0 %v978
    %1350 = vmatpush1.bf16.msra.mxu0 %v977
    %1351 = vmatprep.subr.bf16.mxu0 %v982
    %1352 = vmatpush1.bf16.msra.mxu0 %v981
    %1353 = vmatprep.subr.bf16.mxu0 %v986
    %1354 = vmatpush1.bf16.msra.mxu0 %v985
    %1355 = vmatprep.subr.bf16.mxu0 %v990
    %1356 = vmatpush1.bf16.msra.mxu0 %v989
    %1357 = vmatprep.mubr.bf16.mxu0 %v117
    %1358 = vmatmul.mubr.bf16.gmra.mrb[0].mxu0 %v116
    %v1359 = vpop.f32.mrb[0].mxu0
    %v1360 = vadd.f32 %v324, %v1359
    %v1361 = vpop.f32.mrb[0].mxu0
    %v1362 = vadd.f32 %v328, %v1361
    %v1363 = vpop.f32.mrb[0].mxu0
    %v1364 = vadd.f32 %v324, %v1363
    %v1365 = vpop.f32.mrb[0].mxu0
    %v1366 = vadd.f32 %v328, %v1365
    %1367 = vdwg.mxu0
    %1368 = vmatprep.subr.bf16.mxu0 %v994
    %1369 = vmatpush1.bf16.msra.mxu0 %v993
    %1370 = vmatprep.subr.bf16.mxu0 %v998
    %1371 = vmatpush1.bf16.msra.mxu0 %v997
    %1372 = vmatprep.subr.bf16.mxu0 %v1002
    %1373 = vmatpush1.bf16.msra.mxu0 %v1001
    %1374 = vmatprep.subr.bf16.mxu0 %v1006
    %1375 = vmatpush1.bf16.msra.mxu0 %v1005
    %1376 = vmatprep.subr.bf16.mxu0 %v1010
    %1377 = vmatpush1.bf16.msra.mxu0 %v1009
    %1378 = vmatprep.subr.bf16.mxu0 %v1014
    %1379 = vmatpush1.bf16.msra.mxu0 %v1013
    %1380 = vmatprep.subr.bf16.mxu0 %v1018
    %1381 = vmatpush1.bf16.msra.mxu0 %v1017
    %1382 = vmatprep.subr.bf16.mxu0 %v1022
    %1383 = vmatpush1.bf16.msra.mxu0 %v1021
    %1384 = vmatprep.subr.bf16.mxu0 %v1026
    %1385 = vmatpush1.bf16.msra.mxu0 %v1025
    %1386 = vmatprep.subr.bf16.mxu0 %v1030
    %1387 = vmatpush1.bf16.msra.mxu0 %v1029
    %1388 = vmatprep.subr.bf16.mxu0 %v1034
    %1389 = vmatpush1.bf16.msra.mxu0 %v1033
    %1390 = vmatprep.subr.bf16.mxu0 %v1038
    %1391 = vmatpush1.bf16.msra.mxu0 %v1037
    %1392 = vmatprep.subr.bf16.mxu0 %v1042
    %1393 = vmatpush1.bf16.msra.mxu0 %v1041
    %1394 = vmatprep.subr.bf16.mxu0 %v1046
    %1395 = vmatpush1.bf16.msra.mxu0 %v1045
    %1396 = vmatprep.subr.bf16.mxu0 %v1050
    %1397 = vmatpush1.bf16.msra.mxu0 %v1049
    %1398 = vmatprep.subr.bf16.mxu0 %v1054
    %1399 = vmatpush1.bf16.msra.mxu0 %v1053
    %1400 = vmatprep.mubr.bf16.mxu0 %v119
    %1401 = vmatmul.mubr.bf16.gmra.mrb[0].mxu0 %v118
    %v1402 = vpop.f32.mrb[0].mxu0
    %v1403 = vadd.f32 %v1360, %v1402
    %v1404 = vpop.f32.mrb[0].mxu0
    %v1405 = vadd.f32 %v1362, %v1404
    %v1406 = vpop.f32.mrb[0].mxu0
    %v1407 = vadd.f32 %v1364, %v1406
    %v1408 = vpop.f32.mrb[0].mxu0
    %v1409 = vadd.f32 %v1366, %v1408
    %1410 = vdwg.mxu0
    %1411 = vmatprep.subr.bf16.mxu0 %v1058
    %1412 = vmatpush1.bf16.msra.mxu0 %v1057
    %1413 = vmatprep.subr.bf16.mxu0 %v1062
    %1414 = vmatpush1.bf16.msra.mxu0 %v1061
    %1415 = vmatprep.subr.bf16.mxu0 %v1066
    %1416 = vmatpush1.bf16.msra.mxu0 %v1065
    %1417 = vmatprep.subr.bf16.mxu0 %v1070
    %1418 = vmatpush1.bf16.msra.mxu0 %v1069
    %1419 = vmatprep.subr.bf16.mxu0 %v1074
    %1420 = vmatpush1.bf16.msra.mxu0 %v1073
    %1421 = vmatprep.subr.bf16.mxu0 %v1078
    %1422 = vmatpush1.bf16.msra.mxu0 %v1077
    %1423 = vmatprep.subr.bf16.mxu0 %v1082
    %1424 = vmatpush1.bf16.msra.mxu0 %v1081
    %1425 = vmatprep.subr.bf16.mxu0 %v1086
    %1426 = vmatpush1.bf16.msra.mxu0 %v1085
    %1427 = vmatprep.subr.bf16.mxu0 %v1090
    %1428 = vmatpush1.bf16.msra.mxu0 %v1089
    %1429 = vmatprep.subr.bf16.mxu0 %v1094
    %1430 = vmatpush1.bf16.msra.mxu0 %v1093
    %1431 = vmatprep.subr.bf16.mxu0 %v1098
    %1432 = vmatpush1.bf16.msra.mxu0 %v1097
    %1433 = vmatprep.subr.bf16.mxu0 %v1102
    %1434 = vmatpush1.bf16.msra.mxu0 %v1101
    %1435 = vmatprep.subr.bf16.mxu0 %v1106
    %1436 = vmatpush1.bf16.msra.mxu0 %v1105
    %1437 = vmatprep.subr.bf16.mxu0 %v1110
    %1438 = vmatpush1.bf16.msra.mxu0 %v1109
    %1439 = vmatprep.subr.bf16.mxu0 %v1114
    %1440 = vmatpush1.bf16.msra.mxu0 %v1113
    %1441 = vmatprep.subr.bf16.mxu0 %v1118
    %1442 = vmatpush1.bf16.msra.mxu0 %v1117
    %1443 = vmatprep.mubr.bf16.mxu0 %v121
    %1444 = vmatmul.mubr.bf16.gmra.mrb[0].mxu0 %v120
    %v1445 = vpop.f32.mrb[0].mxu0
    %v1446 = vadd.f32 %v1403, %v1445
    %v1447 = vpop.f32.mrb[0].mxu0
    %v1448 = vadd.f32 %v1405, %v1447
    %v1449 = vpop.f32.mrb[0].mxu0
    %v1450 = vadd.f32 %v1407, %v1449
    %v1451 = vpop.f32.mrb[0].mxu0
    %v1452 = vadd.f32 %v1409, %v1451
    %1453 = vdwg.mxu0
    %1454 = vmatprep.subr.bf16.mxu0 %v1122
    %1455 = vmatpush1.bf16.msra.mxu0 %v1121
    %1456 = vmatprep.subr.bf16.mxu0 0
    %1457 = vmatpush1.bf16.msra.mxu0 0
    %1458 = vmatprep.subr.bf16.mxu0 0
    %1459 = vmatpush1.bf16.msra.mxu0 0
    %1460 = vmatprep.subr.bf16.mxu0 0
    %1461 = vmatpush1.bf16.msra.mxu0 0
    %1462 = vmatprep.subr.bf16.mxu0 0
    %1463 = vmatpush1.bf16.msra.mxu0 0
    %1464 = vmatprep.subr.bf16.mxu0 0
    %1465 = vmatpush1.bf16.msra.mxu0 0
    %1466 = vmatprep.subr.bf16.mxu0 0
    %1467 = vmatpush1.bf16.msra.mxu0 0
    %1468 = vmatprep.subr.bf16.mxu0 0
    %1469 = vmatpush1.bf16.msra.mxu0 0
    %1470 = vmatprep.subr.bf16.mxu0 0
    %1471 = vmatpush1.bf16.msra.mxu0 0
    %1472 = vmatprep.subr.bf16.mxu0 0
    %1473 = vmatpush1.bf16.msra.mxu0 0
    %1474 = vmatprep.subr.bf16.mxu0 0
    %1475 = vmatpush1.bf16.msra.mxu0 0
    %1476 = vmatprep.subr.bf16.mxu0 0
    %1477 = vmatpush1.bf16.msra.mxu0 0
    %1478 = vmatprep.subr.bf16.mxu0 0
    %1479 = vmatpush1.bf16.msra.mxu0 0
    %1480 = vmatprep.subr.bf16.mxu0 0
    %1481 = vmatpush1.bf16.msra.mxu0 0
    %1482 = vmatprep.subr.bf16.mxu0 0
    %1483 = vmatpush1.bf16.msra.mxu0 0
    %1484 = vmatprep.subr.bf16.mxu0 0
    %1485 = vmatpush1.bf16.msra.mxu0 0
    %1486 = vmatprep.mubr.bf16.mxu0 0
    %1487 = vmatmul.mubr.bf16.gmra.mrb[0].mxu0 %v1323
    %v1488 = vpop.f32.mrb[0].mxu0
    %v1489 = vadd.f32 %v1446, %v1488
    %v1490 = vpop.f32.mrb[0].mxu0
    %v1491 = vadd.f32 %v1448, %v1490
    %v1492 = vpop.f32.mrb[0].mxu0
    %v1493 = vadd.f32 %v1450, %v1492
    %v1494 = vpop.f32.mrb[0].mxu0
    %v1495 = vadd.f32 %v1452, %v1494
    %1496 = vdwg.mxu0
    %1497 = vmatprep.subr.bf16.mxu0 %v932
    %1498 = vmatpush1.bf16.msra.mxu0 %v931
    %1499 = vmatprep.subr.bf16.mxu0 %v936
    %1500 = vmatpush1.bf16.msra.mxu0 %v935
    %1501 = vmatprep.subr.bf16.mxu0 %v940
    %1502 = vmatpush1.bf16.msra.mxu0 %v939
    %1503 = vmatprep.subr.bf16.mxu0 %v944
    %1504 = vmatpush1.bf16.msra.mxu0 %v943
    %1505 = vmatprep.subr.bf16.mxu0 %v948
    %1506 = vmatpush1.bf16.msra.mxu0 %v947
    %1507 = vmatprep.subr.bf16.mxu0 %v952
    %1508 = vmatpush1.bf16.msra.mxu0 %v951
    %1509 = vmatprep.subr.bf16.mxu0 %v956
    %1510 = vmatpush1.bf16.msra.mxu0 %v955
    %1511 = vmatprep.subr.bf16.mxu0 %v960
    %1512 = vmatpush1.bf16.msra.mxu0 %v959
    %1513 = vmatprep.subr.bf16.mxu0 %v964
    %1514 = vmatpush1.bf16.msra.mxu0 %v963
    %1515 = vmatprep.subr.bf16.mxu0 %v968
    %1516 = vmatpush1.bf16.msra.mxu0 %v967
    %1517 = vmatprep.subr.bf16.mxu0 %v972
    %1518 = vmatpush1.bf16.msra.mxu0 %v971
    %1519 = vmatprep.subr.bf16.mxu0 %v976
    %1520 = vmatpush1.bf16.msra.mxu0 %v975
    %1521 = vmatprep.subr.bf16.mxu0 %v980
    %1522 = vmatpush1.bf16.msra.mxu0 %v979
    %1523 = vmatprep.subr.bf16.mxu0 %v984
    %1524 = vmatpush1.bf16.msra.mxu0 %v983
    %1525 = vmatprep.subr.bf16.mxu0 %v988
    %1526 = vmatpush1.bf16.msra.mxu0 %v987
    %1527 = vmatprep.subr.bf16.mxu0 %v992
    %1528 = vmatpush1.bf16.msra.mxu0 %v991
    %1529 = vmatprep.mubr.bf16.mxu0 %v117
    %1530 = vmatmul.mubr.bf16.gmra.mrb[0].mxu0 %v116
    %v1531 = vpop.f32.mrb[0].mxu0
    %v1532 = vadd.f32 %v332, %v1531
    %v1533 = vpop.f32.mrb[0].mxu0
    %v1534 = vadd.f32 %v336, %v1533
    %v1535 = vpop.f32.mrb[0].mxu0
    %v1536 = vadd.f32 %v332, %v1535
    %v1537 = vpop.f32.mrb[0].mxu0
    %v1538 = vadd.f32 %v336, %v1537
    %1539 = vdwg.mxu0
    %1540 = vmatprep.subr.bf16.mxu0 %v996
    %1541 = vmatpush1.bf16.msra.mxu0 %v995
    %1542 = vmatprep.subr.bf16.mxu0 %v1000
    %1543 = vmatpush1.bf16.msra.mxu0 %v999
    %1544 = vmatprep.subr.bf16.mxu0 %v1004
    %1545 = vmatpush1.bf16.msra.mxu0 %v1003
    %1546 = vmatprep.subr.bf16.mxu0 %v1008
    %1547 = vmatpush1.bf16.msra.mxu0 %v1007
    %1548 = vmatprep.subr.bf16.mxu0 %v1012
    %1549 = vmatpush1.bf16.msra.mxu0 %v1011
    %1550 = vmatprep.subr.bf16.mxu0 %v1016
    %1551 = vmatpush1.bf16.msra.mxu0 %v1015
    %1552 = vmatprep.subr.bf16.mxu0 %v1020
    %1553 = vmatpush1.bf16.msra.mxu0 %v1019
    %1554 = vmatprep.subr.bf16.mxu0 %v1024
    %1555 = vmatpush1.bf16.msra.mxu0 %v1023
    %1556 = vmatprep.subr.bf16.mxu0 %v1028
    %1557 = vmatpush1.bf16.msra.mxu0 %v1027
    %1558 = vmatprep.subr.bf16.mxu0 %v1032
    %1559 = vmatpush1.bf16.msra.mxu0 %v1031
    %1560 = vmatprep.subr.bf16.mxu0 %v1036
    %1561 = vmatpush1.bf16.msra.mxu0 %v1035
    %1562 = vmatprep.subr.bf16.mxu0 %v1040
    %1563 = vmatpush1.bf16.msra.mxu0 %v1039
    %1564 = vmatprep.subr.bf16.mxu0 %v1044
    %1565 = vmatpush1.bf16.msra.mxu0 %v1043
    %1566 = vmatprep.subr.bf16.mxu0 %v1048
    %1567 = vmatpush1.bf16.msra.mxu0 %v1047
    %1568 = vmatprep.subr.bf16.mxu0 %v1052
    %1569 = vmatpush1.bf16.msra.mxu0 %v1051
    %1570 = vmatprep.subr.bf16.mxu0 %v1056
    %1571 = vmatpush1.bf16.msra.mxu0 %v1055
    %1572 = vmatprep.mubr.bf16.mxu0 %v119
    %1573 = vmatmul.mubr.bf16.gmra.mrb[0].mxu0 %v118
    %v1574 = vpop.f32.mrb[0].mxu0
    %v1575 = vadd.f32 %v1532, %v1574
    %v1576 = vpop.f32.mrb[0].mxu0
    %v1577 = vadd.f32 %v1534, %v1576
    %v1578 = vpop.f32.mrb[0].mxu0
    %v1579 = vadd.f32 %v1536, %v1578
    %v1580 = vpop.f32.mrb[0].mxu0
    %v1581 = vadd.f32 %v1538, %v1580
    %1582 = vdwg.mxu0
    %1583 = vmatprep.subr.bf16.mxu0 %v1060
    %1584 = vmatpush1.bf16.msra.mxu0 %v1059
    %1585 = vmatprep.subr.bf16.mxu0 %v1064
    %1586 = vmatpush1.bf16.msra.mxu0 %v1063
    %1587 = vmatprep.subr.bf16.mxu0 %v1068
    %1588 = vmatpush1.bf16.msra.mxu0 %v1067
    %1589 = vmatprep.subr.bf16.mxu0 %v1072
    %1590 = vmatpush1.bf16.msra.mxu0 %v1071
    %1591 = vmatprep.subr.bf16.mxu0 %v1076
    %1592 = vmatpush1.bf16.msra.mxu0 %v1075
    %1593 = vmatprep.subr.bf16.mxu0 %v1080
    %1594 = vmatpush1.bf16.msra.mxu0 %v1079
    %1595 = vmatprep.subr.bf16.mxu0 %v1084
    %1596 = vmatpush1.bf16.msra.mxu0 %v1083
    %1597 = vmatprep.subr.bf16.mxu0 %v1088
    %1598 = vmatpush1.bf16.msra.mxu0 %v1087
    %1599 = vmatprep.subr.bf16.mxu0 %v1092
    %1600 = vmatpush1.bf16.msra.mxu0 %v1091
    %1601 = vmatprep.subr.bf16.mxu0 %v1096
    %1602 = vmatpush1.bf16.msra.mxu0 %v1095
    %1603 = vmatprep.subr.bf16.mxu0 %v1100
    %1604 = vmatpush1.bf16.msra.mxu0 %v1099
    %1605 = vmatprep.subr.bf16.mxu0 %v1104
    %1606 = vmatpush1.bf16.msra.mxu0 %v1103
    %1607 = vmatprep.subr.bf16.mxu0 %v1108
    %1608 = vmatpush1.bf16.msra.mxu0 %v1107
    %1609 = vmatprep.subr.bf16.mxu0 %v1112
    %1610 = vmatpush1.bf16.msra.mxu0 %v1111
    %1611 = vmatprep.subr.bf16.mxu0 %v1116
    %1612 = vmatpush1.bf16.msra.mxu0 %v1115
    %1613 = vmatprep.subr.bf16.mxu0 %v1120
    %1614 = vmatpush1.bf16.msra.mxu0 %v1119
    %1615 = vmatprep.mubr.bf16.mxu0 %v121
    %1616 = vmatmul.mubr.bf16.gmra.mrb[0].mxu0 %v120
    %v1617 = vpop.f32.mrb[0].mxu0
    %v1618 = vadd.f32 %v1575, %v1617
    %v1619 = vpop.f32.mrb[0].mxu0
    %v1620 = vadd.f32 %v1577, %v1619
    %v1621 = vpop.f32.mrb[0].mxu0
    %v1622 = vadd.f32 %v1579, %v1621
    %v1623 = vpop.f32.mrb[0].mxu0
    %v1624 = vadd.f32 %v1581, %v1623
    %1625 = vdwg.mxu0
    %1626 = vmatprep.subr.bf16.mxu0 %v1124
    %1627 = vmatpush1.bf16.msra.mxu0 %v1123
    %1628 = vmatprep.subr.bf16.mxu0 0
    %1629 = vmatpush1.bf16.msra.mxu0 0
    %1630 = vmatprep.subr.bf16.mxu0 0
    %1631 = vmatpush1.bf16.msra.mxu0 0
    %1632 = vmatprep.subr.bf16.mxu0 0
    %1633 = vmatpush1.bf16.msra.mxu0 0
    %1634 = vmatprep.subr.bf16.mxu0 0
    %1635 = vmatpush1.bf16.msra.mxu0 0
    %1636 = vmatprep.subr.bf16.mxu0 0
    %1637 = vmatpush1.bf16.msra.mxu0 0
    %1638 = vmatprep.subr.bf16.mxu0 0
    %1639 = vmatpush1.bf16.msra.mxu0 0
    %1640 = vmatprep.subr.bf16.mxu0 0
    %1641 = vmatpush1.bf16.msra.mxu0 0
    %1642 = vmatprep.subr.bf16.mxu0 0
    %1643 = vmatpush1.bf16.msra.mxu0 0
    %1644 = vmatprep.subr.bf16.mxu0 0
    %1645 = vmatpush1.bf16.msra.mxu0 0
    %1646 = vmatprep.subr.bf16.mxu0 0
    %1647 = vmatpush1.bf16.msra.mxu0 0
    %1648 = vmatprep.subr.bf16.mxu0 0
    %1649 = vmatpush1.bf16.msra.mxu0 0
    %1650 = vmatprep.subr.bf16.mxu0 0
    %1651 = vmatpush1.bf16.msra.mxu0 0
    %1652 = vmatprep.subr.bf16.mxu0 0
    %1653 = vmatpush1.bf16.msra.mxu0 0
    %1654 = vmatprep.subr.bf16.mxu0 0
    %1655 = vmatpush1.bf16.msra.mxu0 0
    %1656 = vmatprep.subr.bf16.mxu0 0
    %1657 = vmatpush1.bf16.msra.mxu0 0
    %1658 = vmatprep.mubr.bf16.mxu0 0
    %1659 = vmatmul.mubr.bf16.gmra.mrb[0].mxu0 %v1323
    %v1660 = vpop.f32.mrb[0].mxu0
    %v1661 = vadd.f32 %v1618, %v1660
    %v1662 = vpop.f32.mrb[0].mxu0
    %v1663 = vadd.f32 %v1620, %v1662
    %v1664 = vpop.f32.mrb[0].mxu0
    %v1665 = vadd.f32 %v1622, %v1664
    %v1666 = vpop.f32.mrb[0].mxu0
    %v1667 = vadd.f32 %v1624, %v1666
    %1668 = vdwg.mxu0
    %v1669 = vmax.f32 %v1489, 0.0
    %v1670 = vmax.f32 %v1491, 0.0
    %v1671 = vmax.f32 %v1661, 0.0
    %v1672 = vmax.f32 %v1663, 0.0
    %v1673 = vmax.f32 %v1493, 0.0
    %v1674 = vmax.f32 %v1495, 0.0
    %v1675 = vmax.f32 %v1665, 0.0
    %v1676 = vmax.f32 %v1667, 0.0
    %v1677 = vpack.c.bf16 %v1673, %v1669
    %v1678 = vpack.c.bf16 %v1674, %v1670
    %v1679 = vpack.c.bf16 %v1675, %v1671
    %v1680 = vpack.c.bf16 %v1676, %v1672
    %v1681 = vld [vmem:[#allocation7] sm:$0xff]
    %v1682 = vld [vmem:[#allocation7 + $0x8] sm:$0xff]
    %v1683 = vld [vmem:[#allocation7 + $0x10] sm:$0xff]
    %v1684 = vld [vmem:[#allocation7 + $0x18] sm:$0xff]
    %v1685 = vld [vmem:[#allocation7 + $0x20] sm:$0xff]
    %v1686 = vld [vmem:[#allocation7 + $0x28] sm:$0xff]
    %v1687 = vld [vmem:[#allocation7 + $0x30] sm:$0xff]
    %v1688 = vld [vmem:[#allocation7 + $0x38] sm:$0xff]
    %v1689 = vld [vmem:[#allocation7 + $0x40] sm:$0xff]
    %v1690 = vld [vmem:[#allocation7 + $0x48] sm:$0xff]
    %v1691 = vld [vmem:[#allocation7 + $0x50] sm:$0xff]
    %v1692 = vld [vmem:[#allocation7 + $0x58] sm:$0xff]
    %v1693 = vld [vmem:[#allocation7 + $0x60] sm:$0xff]
    %v1694 = vld [vmem:[#allocation7 + $0x68] sm:$0xff]
    %v1695 = vld [vmem:[#allocation7 + $0x70] sm:$0xff]
    %v1696 = vld [vmem:[#allocation7 + $0x78] sm:$0xff]
    %v1697 = vld [vmem:[#allocation7 + $0x80] sm:$0xff]
    %v1698 = vld [vmem:[#allocation7 + $0x88] sm:$0xff]
    %v1699 = vld [vmem:[#allocation7 + $0x90] sm:$0xff]
    %v1700 = vld [vmem:[#allocation7 + $0x98] sm:$0xff]
    %v1701 = vld [vmem:[#allocation7 + $0xa0] sm:$0xff]
    %v1702 = vld [vmem:[#allocation7 + $0xa8] sm:$0xff]
    %v1703 = vld [vmem:[#allocation7 + $0xb0] sm:$0xff]
    %v1704 = vld [vmem:[#allocation7 + $0xb8] sm:$0xff]
    %v1705 = vld [vmem:[#allocation7 + $0xc0] sm:$0xff]
    %v1706 = vld [vmem:[#allocation7 + $0xc8] sm:$0xff]
    %v1707 = vld [vmem:[#allocation7 + $0xd0] sm:$0xff]
    %v1708 = vld [vmem:[#allocation7 + $0xd8] sm:$0xff]
    %v1709 = vld [vmem:[#allocation7 + $0xe0] sm:$0xff]
    %v1710 = vld [vmem:[#allocation7 + $0xe8] sm:$0xff]
    %v1711 = vld [vmem:[#allocation7 + $0xf0] sm:$0xff]
    %v1712 = vld [vmem:[#allocation7 + $0xf8] sm:$0xff]
    %v1713 = vld [vmem:[#allocation7 + $0x100] sm:$0xff]
    %v1714 = vld [vmem:[#allocation7 + $0x108] sm:$0xff]
    %v1715 = vld [vmem:[#allocation7 + $0x110] sm:$0xff]
    %v1716 = vld [vmem:[#allocation7 + $0x118] sm:$0xff]
    %v1717 = vld [vmem:[#allocation7 + $0x120] sm:$0xff]
    %v1718 = vld [vmem:[#allocation7 + $0x128] sm:$0xff]
    %v1719 = vld [vmem:[#allocation7 + $0x130] sm:$0xff]
    %v1720 = vld [vmem:[#allocation7 + $0x138] sm:$0xff]
    %v1721 = vld [vmem:[#allocation7 + $0x140] sm:$0xff]
    %v1722 = vld [vmem:[#allocation7 + $0x148] sm:$0xff]
    %v1723 = vld [vmem:[#allocation7 + $0x150] sm:$0xff]
    %v1724 = vld [vmem:[#allocation7 + $0x158] sm:$0xff]
    %v1725 = vld [vmem:[#allocation7 + $0x160] sm:$0xff]
    %v1726 = vld [vmem:[#allocation7 + $0x168] sm:$0xff]
    %v1727 = vld [vmem:[#allocation7 + $0x170] sm:$0xff]
    %v1728 = vld [vmem:[#allocation7 + $0x178] sm:$0xff]
    %v1729 = vld [vmem:[#allocation7 + $0x180] sm:$0xff]
    %v1730 = vld [vmem:[#allocation7 + $0x188] sm:$0xff]
    %v1731 = vld [vmem:[#allocation7 + $0x190] sm:$0xff]
    %v1732 = vld [vmem:[#allocation7 + $0x198] sm:$0xff]
    %v1733 = vld [vmem:[#allocation7 + $0x1a0] sm:$0xff]
    %v1734 = vld [vmem:[#allocation7 + $0x1a8] sm:$0xff]
    %v1735 = vld [vmem:[#allocation7 + $0x1b0] sm:$0xff]
    %v1736 = vld [vmem:[#allocation7 + $0x1b8] sm:$0xff]
    %v1737 = vld [vmem:[#allocation7 + $0x1c0] sm:$0xff]
    %v1738 = vld [vmem:[#allocation7 + $0x1c8] sm:$0xff]
    %v1739 = vld [vmem:[#allocation7 + $0x1d0] sm:$0xff]
    %v1740 = vld [vmem:[#allocation7 + $0x1d8] sm:$0xff]
    %v1741 = vld [vmem:[#allocation7 + $0x1e0] sm:$0xff]
    %v1742 = vld [vmem:[#allocation7 + $0x1e8] sm:$0xff]
    %v1743 = vld [vmem:[#allocation7 + $0x1f0] sm:$0xff]
    %v1744 = vld [vmem:[#allocation7 + $0x1f8] sm:$0xff]
    %v1745 = vld [vmem:[%s4] sm:$0x3]
    %v1747 = vlaneseq
    %v1748 = vshrl.u32 %v1747, 7
    %v1749 = vsub.s32 0, %v1748
    %v1750 = vrot.slane %v1745, %v1749
    %v1751 = vlaneseq
    %v1752 = vshrl.u32 %v1751, 7
    %v1753 = vsub.s32 1, %v1752
    %v1754 = vrot.slane %v1745, %v1753
    %v1821 = vunpack.c.l.b16 %v1681
    %v1822 = vunpack.c.h.b16 %v1681
    %v1823 = vunpack.c.l.b16 %v1682
    %v1824 = vunpack.c.h.b16 %v1682
    %v1825 = vunpack.c.l.b16 %v1683
    %v1826 = vunpack.c.h.b16 %v1683
    %v1827 = vunpack.c.l.b16 %v1684
    %v1828 = vunpack.c.h.b16 %v1684
    %v1829 = vunpack.c.l.b16 %v1685
    %v1830 = vunpack.c.h.b16 %v1685
    %v1831 = vunpack.c.l.b16 %v1686
    %v1832 = vunpack.c.h.b16 %v1686
    %v1833 = vunpack.c.l.b16 %v1687
    %v1834 = vunpack.c.h.b16 %v1687
    %v1835 = vunpack.c.l.b16 %v1688
    %v1836 = vunpack.c.h.b16 %v1688
    %v1837 = vunpack.c.l.b16 %v1689
    %v1838 = vunpack.c.h.b16 %v1689
    %v1839 = vunpack.c.l.b16 %v1690
    %v1840 = vunpack.c.h.b16 %v1690
    %v1841 = vunpack.c.l.b16 %v1691
    %v1842 = vunpack.c.h.b16 %v1691
    %v1843 = vunpack.c.l.b16 %v1692
    %v1844 = vunpack.c.h.b16 %v1692
    %v1845 = vunpack.c.l.b16 %v1693
    %v1846 = vunpack.c.h.b16 %v1693
    %v1847 = vunpack.c.l.b16 %v1694
    %v1848 = vunpack.c.h.b16 %v1694
    %v1849 = vunpack.c.l.b16 %v1695
    %v1850 = vunpack.c.h.b16 %v1695
    %v1851 = vunpack.c.l.b16 %v1696
    %v1852 = vunpack.c.h.b16 %v1696
    %v1853 = vunpack.c.l.b16 %v1697
    %v1854 = vunpack.c.h.b16 %v1697
    %v1855 = vunpack.c.l.b16 %v1698
    %v1856 = vunpack.c.h.b16 %v1698
    %v1857 = vunpack.c.l.b16 %v1699
    %v1858 = vunpack.c.h.b16 %v1699
    %v1859 = vunpack.c.l.b16 %v1700
    %v1860 = vunpack.c.h.b16 %v1700
    %v1861 = vunpack.c.l.b16 %v1701
    %v1862 = vunpack.c.h.b16 %v1701
    %v1863 = vunpack.c.l.b16 %v1702
    %v1864 = vunpack.c.h.b16 %v1702
    %v1865 = vunpack.c.l.b16 %v1703
    %v1866 = vunpack.c.h.b16 %v1703
    %v1867 = vunpack.c.l.b16 %v1704
    %v1868 = vunpack.c.h.b16 %v1704
    %v1869 = vunpack.c.l.b16 %v1705
    %v1870 = vunpack.c.h.b16 %v1705
    %v1871 = vunpack.c.l.b16 %v1706
    %v1872 = vunpack.c.h.b16 %v1706
    %v1873 = vunpack.c.l.b16 %v1707
    %v1874 = vunpack.c.h.b16 %v1707
    %v1875 = vunpack.c.l.b16 %v1708
    %v1876 = vunpack.c.h.b16 %v1708
    %v1877 = vunpack.c.l.b16 %v1709
    %v1878 = vunpack.c.h.b16 %v1709
    %v1879 = vunpack.c.l.b16 %v1710
    %v1880 = vunpack.c.h.b16 %v1710
    %v1881 = vunpack.c.l.b16 %v1711
    %v1882 = vunpack.c.h.b16 %v1711
    %v1883 = vunpack.c.l.b16 %v1712
    %v1884 = vunpack.c.h.b16 %v1712
    %v1885 = vunpack.c.l.b16 %v1713
    %v1886 = vunpack.c.h.b16 %v1713
    %v1887 = vunpack.c.l.b16 %v1714
    %v1888 = vunpack.c.h.b16 %v1714
    %v1889 = vunpack.c.l.b16 %v1715
    %v1890 = vunpack.c.h.b16 %v1715
    %v1891 = vunpack.c.l.b16 %v1716
    %v1892 = vunpack.c.h.b16 %v1716
    %v1893 = vunpack.c.l.b16 %v1717
    %v1894 = vunpack.c.h.b16 %v1717
    %v1895 = vunpack.c.l.b16 %v1718
    %v1896 = vunpack.c.h.b16 %v1718
    %v1897 = vunpack.c.l.b16 %v1719
    %v1898 = vunpack.c.h.b16 %v1719
    %v1899 = vunpack.c.l.b16 %v1720
    %v1900 = vunpack.c.h.b16 %v1720
    %v1901 = vunpack.c.l.b16 %v1721
    %v1902 = vunpack.c.h.b16 %v1721
    %v1903 = vunpack.c.l.b16 %v1722
    %v1904 = vunpack.c.h.b16 %v1722
    %v1905 = vunpack.c.l.b16 %v1723
    %v1906 = vunpack.c.h.b16 %v1723
    %v1907 = vunpack.c.l.b16 %v1724
    %v1908 = vunpack.c.h.b16 %v1724
    %v1909 = vunpack.c.l.b16 %v1725
    %v1910 = vunpack.c.h.b16 %v1725
    %v1911 = vunpack.c.l.b16 %v1726
    %v1912 = vunpack.c.h.b16 %v1726
    %v1913 = vunpack.c.l.b16 %v1727
    %v1914 = vunpack.c.h.b16 %v1727
    %v1915 = vunpack.c.l.b16 %v1728
    %v1916 = vunpack.c.h.b16 %v1728
    %v1917 = vunpack.c.l.b16 %v1729
    %v1918 = vunpack.c.h.b16 %v1729
    %v1919 = vunpack.c.l.b16 %v1730
    %v1920 = vunpack.c.h.b16 %v1730
    %v1921 = vunpack.c.l.b16 %v1731
    %v1922 = vunpack.c.h.b16 %v1731
    %v1923 = vunpack.c.l.b16 %v1732
    %v1924 = vunpack.c.h.b16 %v1732
    %v1925 = vunpack.c.l.b16 %v1733
    %v1926 = vunpack.c.h.b16 %v1733
    %v1927 = vunpack.c.l.b16 %v1734
    %v1928 = vunpack.c.h.b16 %v1734
    %v1929 = vunpack.c.l.b16 %v1735
    %v1930 = vunpack.c.h.b16 %v1735
    %v1931 = vunpack.c.l.b16 %v1736
    %v1932 = vunpack.c.h.b16 %v1736
    %v1933 = vunpack.c.l.b16 %v1737
    %v1934 = vunpack.c.h.b16 %v1737
    %v1935 = vunpack.c.l.b16 %v1738
    %v1936 = vunpack.c.h.b16 %v1738
    %v1937 = vunpack.c.l.b16 %v1739
    %v1938 = vunpack.c.h.b16 %v1739
    %v1939 = vunpack.c.l.b16 %v1740
    %v1940 = vunpack.c.h.b16 %v1740
    %v1941 = vunpack.c.l.b16 %v1741
    %v1942 = vunpack.c.h.b16 %v1741
    %v1943 = vunpack.c.l.b16 %v1742
    %v1944 = vunpack.c.h.b16 %v1742
    %v1945 = vunpack.c.l.b16 %v1743
    %v1946 = vunpack.c.h.b16 %v1743
    %v1947 = vunpack.c.l.b16 %v1744
    %v1948 = vunpack.c.h.b16 %v1744
    %v1949 = vpack.c.b16 %v1823, %v1821
    %v1950 = vpack.c.b16 %v1824, %v1822
    %v1951 = vpack.c.b16 %v1827, %v1825
    %v1952 = vpack.c.b16 %v1828, %v1826
    %v1953 = vpack.c.b16 %v1831, %v1829
    %v1954 = vpack.c.b16 %v1832, %v1830
    %v1955 = vpack.c.b16 %v1835, %v1833
    %v1956 = vpack.c.b16 %v1836, %v1834
    %v1957 = vpack.c.b16 %v1839, %v1837
    %v1958 = vpack.c.b16 %v1840, %v1838
    %v1959 = vpack.c.b16 %v1843, %v1841
    %v1960 = vpack.c.b16 %v1844, %v1842
    %v1961 = vpack.c.b16 %v1847, %v1845
    %v1962 = vpack.c.b16 %v1848, %v1846
    %v1963 = vpack.c.b16 %v1851, %v1849
    %v1964 = vpack.c.b16 %v1852, %v1850
    %v1965 = vpack.c.b16 %v1855, %v1853
    %v1966 = vpack.c.b16 %v1856, %v1854
    %v1967 = vpack.c.b16 %v1859, %v1857
    %v1968 = vpack.c.b16 %v1860, %v1858
    %v1969 = vpack.c.b16 %v1863, %v1861
    %v1970 = vpack.c.b16 %v1864, %v1862
    %v1971 = vpack.c.b16 %v1867, %v1865
    %v1972 = vpack.c.b16 %v1868, %v1866
    %v1973 = vpack.c.b16 %v1871, %v1869
    %v1974 = vpack.c.b16 %v1872, %v1870
    %v1975 = vpack.c.b16 %v1875, %v1873
    %v1976 = vpack.c.b16 %v1876, %v1874
    %v1977 = vpack.c.b16 %v1879, %v1877
    %v1978 = vpack.c.b16 %v1880, %v1878
    %v1979 = vpack.c.b16 %v1883, %v1881
    %v1980 = vpack.c.b16 %v1884, %v1882
    %v1981 = vpack.c.b16 %v1887, %v1885
    %v1982 = vpack.c.b16 %v1888, %v1886
    %v1983 = vpack.c.b16 %v1891, %v1889
    %v1984 = vpack.c.b16 %v1892, %v1890
    %v1985 = vpack.c.b16 %v1895, %v1893
    %v1986 = vpack.c.b16 %v1896, %v1894
    %v1987 = vpack.c.b16 %v1899, %v1897
    %v1988 = vpack.c.b16 %v1900, %v1898
    %v1989 = vpack.c.b16 %v1903, %v1901
    %v1990 = vpack.c.b16 %v1904, %v1902
    %v1991 = vpack.c.b16 %v1907, %v1905
    %v1992 = vpack.c.b16 %v1908, %v1906
    %v1993 = vpack.c.b16 %v1911, %v1909
    %v1994 = vpack.c.b16 %v1912, %v1910
    %v1995 = vpack.c.b16 %v1915, %v1913
    %v1996 = vpack.c.b16 %v1916, %v1914
    %v1997 = vpack.c.b16 %v1919, %v1917
    %v1998 = vpack.c.b16 %v1920, %v1918
    %v1999 = vpack.c.b16 %v1923, %v1921
    %v2000 = vpack.c.b16 %v1924, %v1922
    %v2001 = vpack.c.b16 %v1927, %v1925
    %v2002 = vpack.c.b16 %v1928, %v1926
    %v2003 = vpack.c.b16 %v1931, %v1929
    %v2004 = vpack.c.b16 %v1932, %v1930
    %v2005 = vpack.c.b16 %v1935, %v1933
    %v2006 = vpack.c.b16 %v1936, %v1934
    %v2007 = vpack.c.b16 %v1939, %v1937
    %v2008 = vpack.c.b16 %v1940, %v1938
    %v2009 = vpack.c.b16 %v1943, %v1941
    %v2010 = vpack.c.b16 %v1944, %v1942
    %v2011 = vpack.c.b16 %v1947, %v1945
    %v2012 = vpack.c.b16 %v1948, %v1946
    %2077 = vmatprep.subr.bf16.mxu0 %v1950
    %2078 = vmatpush1.bf16.msra.mxu0 %v1949
    %2079 = vmatprep.subr.bf16.mxu0 %v1952
    %2080 = vmatpush1.bf16.msra.mxu0 %v1951
    %2081 = vmatprep.subr.bf16.mxu0 %v1954
    %2082 = vmatpush1.bf16.msra.mxu0 %v1953
    %2083 = vmatprep.subr.bf16.mxu0 %v1956
    %2084 = vmatpush1.bf16.msra.mxu0 %v1955
    %2085 = vmatprep.subr.bf16.mxu0 %v1958
    %2086 = vmatpush1.bf16.msra.mxu0 %v1957
    %2087 = vmatprep.subr.bf16.mxu0 %v1960
    %2088 = vmatpush1.bf16.msra.mxu0 %v1959
    %2089 = vmatprep.subr.bf16.mxu0 %v1962
    %2090 = vmatpush1.bf16.msra.mxu0 %v1961
    %2091 = vmatprep.subr.bf16.mxu0 %v1964
    %2092 = vmatpush1.bf16.msra.mxu0 %v1963
    %2093 = vmatprep.subr.bf16.mxu0 %v1966
    %2094 = vmatpush1.bf16.msra.mxu0 %v1965
    %2095 = vmatprep.subr.bf16.mxu0 %v1968
    %2096 = vmatpush1.bf16.msra.mxu0 %v1967
    %2097 = vmatprep.subr.bf16.mxu0 %v1970
    %2098 = vmatpush1.bf16.msra.mxu0 %v1969
    %2099 = vmatprep.subr.bf16.mxu0 %v1972
    %2100 = vmatpush1.bf16.msra.mxu0 %v1971
    %2101 = vmatprep.subr.bf16.mxu0 %v1974
    %2102 = vmatpush1.bf16.msra.mxu0 %v1973
    %2103 = vmatprep.subr.bf16.mxu0 %v1976
    %2104 = vmatpush1.bf16.msra.mxu0 %v1975
    %2105 = vmatprep.subr.bf16.mxu0 %v1978
    %2106 = vmatpush1.bf16.msra.mxu0 %v1977
    %2107 = vmatprep.subr.bf16.mxu0 %v1980
    %2108 = vmatpush1.bf16.msra.mxu0 %v1979
    %2109 = vmatprep.mubr.bf16.mxu0 %v1678
    %2110 = vmatmul.mubr.bf16.gmra.mrb[0].mxu0 %v1677
    %v2111 = vpop.f32.mrb[0].mxu0
    %v2112 = vadd.f32 %v1750, %v2111
    %v2113 = vpop.f32.mrb[0].mxu0
    %v2114 = vadd.f32 %v1754, %v2113
    %v2115 = vpop.f32.mrb[0].mxu0
    %v2116 = vadd.f32 %v1750, %v2115
    %v2117 = vpop.f32.mrb[0].mxu0
    %v2118 = vadd.f32 %v1754, %v2117
    %2119 = vdwg.mxu0
    %2120 = vmatprep.subr.bf16.mxu0 %v1982
    %2121 = vmatpush1.bf16.msra.mxu0 %v1981
    %2122 = vmatprep.subr.bf16.mxu0 %v1984
    %2123 = vmatpush1.bf16.msra.mxu0 %v1983
    %2124 = vmatprep.subr.bf16.mxu0 %v1986
    %2125 = vmatpush1.bf16.msra.mxu0 %v1985
    %2126 = vmatprep.subr.bf16.mxu0 %v1988
    %2127 = vmatpush1.bf16.msra.mxu0 %v1987
    %2128 = vmatprep.subr.bf16.mxu0 %v1990
    %2129 = vmatpush1.bf16.msra.mxu0 %v1989
    %2130 = vmatprep.subr.bf16.mxu0 %v1992
    %2131 = vmatpush1.bf16.msra.mxu0 %v1991
    %2132 = vmatprep.subr.bf16.mxu0 %v1994
    %2133 = vmatpush1.bf16.msra.mxu0 %v1993
    %2134 = vmatprep.subr.bf16.mxu0 %v1996
    %2135 = vmatpush1.bf16.msra.mxu0 %v1995
    %2136 = vmatprep.subr.bf16.mxu0 %v1998
    %2137 = vmatpush1.bf16.msra.mxu0 %v1997
    %2138 = vmatprep.subr.bf16.mxu0 %v2000
    %2139 = vmatpush1.bf16.msra.mxu0 %v1999
    %2140 = vmatprep.subr.bf16.mxu0 %v2002
    %2141 = vmatpush1.bf16.msra.mxu0 %v2001
    %2142 = vmatprep.subr.bf16.mxu0 %v2004
    %2143 = vmatpush1.bf16.msra.mxu0 %v2003
    %2144 = vmatprep.subr.bf16.mxu0 %v2006
    %2145 = vmatpush1.bf16.msra.mxu0 %v2005
    %2146 = vmatprep.subr.bf16.mxu0 %v2008
    %2147 = vmatpush1.bf16.msra.mxu0 %v2007
    %2148 = vmatprep.subr.bf16.mxu0 %v2010
    %2149 = vmatpush1.bf16.msra.mxu0 %v2009
    %2150 = vmatprep.subr.bf16.mxu0 %v2012
    %2151 = vmatpush1.bf16.msra.mxu0 %v2011
    %2152 = vmatprep.mubr.bf16.mxu0 %v1680
    %2153 = vmatmul.mubr.bf16.gmra.mrb[0].mxu0 %v1679
    %v2154 = vpop.f32.mrb[0].mxu0
    %v2155 = vadd.f32 %v2112, %v2154
    %v2156 = vpop.f32.mrb[0].mxu0
    %v2157 = vadd.f32 %v2114, %v2156
    %v2158 = vpop.f32.mrb[0].mxu0
    %v2159 = vadd.f32 %v2116, %v2158
    %v2160 = vpop.f32.mrb[0].mxu0
    %v2161 = vadd.f32 %v2118, %v2160
    %2162 = vdwg.mxu0
    %v2163 = vmax.f32 %v2155, 0.0
    %v2164 = vmax.f32 %v2157, 0.0
    %v2165 = vmax.f32 %v2159, 0.0
    %v2166 = vmax.f32 %v2161, 0.0
    %v2167 = vpack.c.bf16 %v2165, %v2163
    %v2168 = vpack.c.bf16 %v2166, %v2164
    %v2169 = vld [vmem:[#allocation8] sm:$0xf]
    %v2170 = vld [vmem:[#allocation8 + $0x4] sm:$0xf]
    %v2171 = vld [vmem:[#allocation8 + $0x8] sm:$0xf]
    %v2172 = vld [vmem:[#allocation8 + $0xc] sm:$0xf]
    %v2173 = vld [vmem:[#allocation8 + $0x10] sm:$0xf]
    %v2174 = vld [vmem:[#allocation8 + $0x14] sm:$0xf]
    %v2175 = vld [vmem:[#allocation8 + $0x18] sm:$0xf]
    %v2176 = vld [vmem:[#allocation8 + $0x1c] sm:$0xf]
    %v2177 = vld [vmem:[#allocation8 + $0x20] sm:$0xf]
    %v2178 = vld [vmem:[#allocation8 + $0x24] sm:$0xf]
    %v2179 = vld [vmem:[#allocation8 + $0x28] sm:$0xf]
    %v2180 = vld [vmem:[#allocation8 + $0x2c] sm:$0xf]
    %v2181 = vld [vmem:[#allocation8 + $0x30] sm:$0xf]
    %v2182 = vld [vmem:[#allocation8 + $0x34] sm:$0xf]
    %v2183 = vld [vmem:[#allocation8 + $0x38] sm:$0xf]
    %v2184 = vld [vmem:[#allocation8 + $0x3c] sm:$0xf]
    %v2185 = vld [vmem:[#allocation8 + $0x40] sm:$0xf]
    %v2186 = vld [vmem:[#allocation8 + $0x44] sm:$0xf]
    %v2187 = vld [vmem:[#allocation8 + $0x48] sm:$0xf]
    %v2188 = vld [vmem:[#allocation8 + $0x4c] sm:$0xf]
    %v2189 = vld [vmem:[#allocation8 + $0x50] sm:$0xf]
    %v2190 = vld [vmem:[#allocation8 + $0x54] sm:$0xf]
    %v2191 = vld [vmem:[#allocation8 + $0x58] sm:$0xf]
    %v2192 = vld [vmem:[#allocation8 + $0x5c] sm:$0xf]
    %v2193 = vld [vmem:[#allocation8 + $0x60] sm:$0xf]
    %v2194 = vld [vmem:[#allocation8 + $0x64] sm:$0xf]
    %v2195 = vld [vmem:[#allocation8 + $0x68] sm:$0xf]
    %v2196 = vld [vmem:[#allocation8 + $0x6c] sm:$0xf]
    %v2197 = vld [vmem:[#allocation8 + $0x70] sm:$0xf]
    %v2198 = vld [vmem:[#allocation8 + $0x74] sm:$0xf]
    %v2199 = vld [vmem:[#allocation8 + $0x78] sm:$0xf]
    %v2200 = vld [vmem:[#allocation8 + $0x7c] sm:$0xf]
    %v2201 = vld [vmem:[%s6] sm:$0x1]
    %v2203 = vlaneseq
    %v2204 = vshrl.u32 %v2203, 7
    %v2205 = vsub.s32 0, %v2204
    %v2206 = vrot.slane %v2201, %v2205
    %v2240 = vunpack.c.l.b16 %v2169
    %v2241 = vunpack.c.l.b16 %v2170
    %v2242 = vunpack.c.l.b16 %v2171
    %v2243 = vunpack.c.l.b16 %v2172
    %v2244 = vunpack.c.l.b16 %v2173
    %v2245 = vunpack.c.l.b16 %v2174
    %v2246 = vunpack.c.l.b16 %v2175
    %v2247 = vunpack.c.l.b16 %v2176
    %v2248 = vunpack.c.l.b16 %v2177
    %v2249 = vunpack.c.l.b16 %v2178
    %v2250 = vunpack.c.l.b16 %v2179
    %v2251 = vunpack.c.l.b16 %v2180
    %v2252 = vunpack.c.l.b16 %v2181
    %v2253 = vunpack.c.l.b16 %v2182
    %v2254 = vunpack.c.l.b16 %v2183
    %v2255 = vunpack.c.l.b16 %v2184
    %v2256 = vunpack.c.l.b16 %v2185
    %v2257 = vunpack.c.l.b16 %v2186
    %v2258 = vunpack.c.l.b16 %v2187
    %v2259 = vunpack.c.l.b16 %v2188
    %v2260 = vunpack.c.l.b16 %v2189
    %v2261 = vunpack.c.l.b16 %v2190
    %v2262 = vunpack.c.l.b16 %v2191
    %v2263 = vunpack.c.l.b16 %v2192
    %v2264 = vunpack.c.l.b16 %v2193
    %v2265 = vunpack.c.l.b16 %v2194
    %v2266 = vunpack.c.l.b16 %v2195
    %v2267 = vunpack.c.l.b16 %v2196
    %v2268 = vunpack.c.l.b16 %v2197
    %v2269 = vunpack.c.l.b16 %v2198
    %v2270 = vunpack.c.l.b16 %v2199
    %v2271 = vunpack.c.l.b16 %v2200
    %v2272 = vpack.c.b16 %v2241, %v2240
    %v2273 = vpack.c.b16 %v2243, %v2242
    %v2274 = vpack.c.b16 %v2245, %v2244
    %v2275 = vpack.c.b16 %v2247, %v2246
    %v2276 = vpack.c.b16 %v2249, %v2248
    %v2277 = vpack.c.b16 %v2251, %v2250
    %v2278 = vpack.c.b16 %v2253, %v2252
    %v2279 = vpack.c.b16 %v2255, %v2254
    %v2280 = vpack.c.b16 %v2257, %v2256
    %v2281 = vpack.c.b16 %v2259, %v2258
    %v2282 = vpack.c.b16 %v2261, %v2260
    %v2283 = vpack.c.b16 %v2263, %v2262
    %v2284 = vpack.c.b16 %v2265, %v2264
    %v2285 = vpack.c.b16 %v2267, %v2266
    %v2286 = vpack.c.b16 %v2269, %v2268
    %v2287 = vpack.c.b16 %v2271, %v2270
    %2304 = vmatprep.subr.bf16.mxu0 0
    %2305 = vmatpush1.bf16.msra.mxu0 %v2272
    %2306 = vmatprep.subr.bf16.mxu0 0
    %2307 = vmatpush1.bf16.msra.mxu0 %v2273
    %2308 = vmatprep.subr.bf16.mxu0 0
    %2309 = vmatpush1.bf16.msra.mxu0 %v2274
    %2310 = vmatprep.subr.bf16.mxu0 0
    %2311 = vmatpush1.bf16.msra.mxu0 %v2275
    %2312 = vmatprep.subr.bf16.mxu0 0
    %2313 = vmatpush1.bf16.msra.mxu0 %v2276
    %2314 = vmatprep.subr.bf16.mxu0 0
    %2315 = vmatpush1.bf16.msra.mxu0 %v2277
    %2316 = vmatprep.subr.bf16.mxu0 0
    %2317 = vmatpush1.bf16.msra.mxu0 %v2278
    %2318 = vmatprep.subr.bf16.mxu0 0
    %2319 = vmatpush1.bf16.msra.mxu0 %v2279
    %2320 = vmatprep.subr.bf16.mxu0 0
    %2321 = vmatpush1.bf16.msra.mxu0 %v2280
    %2322 = vmatprep.subr.bf16.mxu0 0
    %2323 = vmatpush1.bf16.msra.mxu0 %v2281
    %2324 = vmatprep.subr.bf16.mxu0 0
    %2325 = vmatpush1.bf16.msra.mxu0 %v2282
    %2326 = vmatprep.subr.bf16.mxu0 0
    %2327 = vmatpush1.bf16.msra.mxu0 %v2283
    %2328 = vmatprep.subr.bf16.mxu0 0
    %2329 = vmatpush1.bf16.msra.mxu0 %v2284
    %2330 = vmatprep.subr.bf16.mxu0 0
    %2331 = vmatpush1.bf16.msra.mxu0 %v2285
    %2332 = vmatprep.subr.bf16.mxu0 0
    %2333 = vmatpush1.bf16.msra.mxu0 %v2286
    %2334 = vmatprep.subr.bf16.mxu0 0
    %2335 = vmatpush1.bf16.msra.mxu0 %v2287
    %2336 = vmatprep.mubr.bf16.mxu0 %v2168
    %2337 = vmatmul.mubr.bf16.gmra.mrb[0].mxu0 %v2167
    %v2338 = vpop.f32.mrb[0].mxu0
    %v2339 = vadd.f32 %v2206, %v2338
    %v2340 = vpop.f32.mrb[0].mxu0
    %v2341 = vpop.f32.mrb[0].mxu0
    %v2342 = vadd.f32 %v2206, %v2341
    %v2343 = vpop.f32.mrb[0].mxu0
    %2344 = vdwg.mxu0
    %v2345 = vmax.f32 %v2339, 0.0
    %v2346 = vmax.f32 %v2342, 0.0
    %v2347 = vpack.c.bf16 %v2346, %v2345
    %v2348 = vld [vmem:[#allocation10] sm:$0xf]
    %v2349 = vld [vmem:[#allocation10 + $0x4] sm:$0xf]
    %v2350 = vld [vmem:[#allocation10 + $0x8] sm:$0xf]
    %v2351 = vld [vmem:[#allocation10 + $0xc] sm:$0xf]
    %v2352 = vld [vmem:[#allocation10 + $0x10] sm:$0xf]
    %v2353 = vld [vmem:[#allocation10 + $0x14] sm:$0xf]
    %v2354 = vld [vmem:[#allocation10 + $0x18] sm:$0xf]
    %v2355 = vld [vmem:[#allocation10 + $0x1c] sm:$0xf]
    %v2356 = vld [vmem:[#allocation10 + $0x20] sm:$0xf]
    %v2357 = vld [vmem:[#allocation10 + $0x24] sm:$0xf]
    %v2358 = vld [vmem:[#allocation10 + $0x28] sm:$0xf]
    %v2359 = vld [vmem:[#allocation10 + $0x2c] sm:$0xf]
    %v2360 = vld [vmem:[#allocation10 + $0x30] sm:$0xf]
    %v2361 = vld [vmem:[#allocation10 + $0x34] sm:$0xf]
    %v2362 = vld [vmem:[#allocation10 + $0x38] sm:$0xf]
    %v2363 = vld [vmem:[#allocation10 + $0x3c] sm:$0xf]
    %v2364 = vld [vmem:[%s8] sm:$0x1]
    %v2366 = vlaneseq
    %v2367 = vshrl.u32 %v2366, 7
    %v2368 = vsub.s32 0, %v2367
    %v2369 = vrot.slane %v2364, %v2368
    %v2387 = vunpack.c.l.b16 %v2348
    %v2388 = vunpack.c.l.b16 %v2349
    %v2389 = vunpack.c.l.b16 %v2350
    %v2390 = vunpack.c.l.b16 %v2351
    %v2391 = vunpack.c.l.b16 %v2352
    %v2392 = vunpack.c.l.b16 %v2353
    %v2393 = vunpack.c.l.b16 %v2354
    %v2394 = vunpack.c.l.b16 %v2355
    %v2395 = vunpack.c.l.b16 %v2356
    %v2396 = vunpack.c.l.b16 %v2357
    %v2397 = vunpack.c.l.b16 %v2358
    %v2398 = vunpack.c.l.b16 %v2359
    %v2399 = vunpack.c.l.b16 %v2360
    %v2400 = vunpack.c.l.b16 %v2361
    %v2401 = vunpack.c.l.b16 %v2362
    %v2402 = vunpack.c.l.b16 %v2363
    %v2403 = vpack.c.b16 %v2388, %v2387
    %v2404 = vpack.c.b16 %v2390, %v2389
    %v2405 = vpack.c.b16 %v2392, %v2391
    %v2406 = vpack.c.b16 %v2394, %v2393
    %v2407 = vpack.c.b16 %v2396, %v2395
    %v2408 = vpack.c.b16 %v2398, %v2397
    %v2409 = vpack.c.b16 %v2400, %v2399
    %v2410 = vpack.c.b16 %v2402, %v2401
    %2419 = vmatprep.subr.bf16.mxu0 0
    %2420 = vmatpush1.bf16.msra.mxu0 %v2403
    %2421 = vmatprep.subr.bf16.mxu0 0
    %2422 = vmatpush1.bf16.msra.mxu0 %v2404
    %2423 = vmatprep.subr.bf16.mxu0 0
    %2424 = vmatpush1.bf16.msra.mxu0 %v2405
    %2425 = vmatprep.subr.bf16.mxu0 0
    %2426 = vmatpush1.bf16.msra.mxu0 %v2406
    %2427 = vmatprep.subr.bf16.mxu0 0
    %2428 = vmatpush1.bf16.msra.mxu0 %v2407
    %2429 = vmatprep.subr.bf16.mxu0 0
    %2430 = vmatpush1.bf16.msra.mxu0 %v2408
    %2431 = vmatprep.subr.bf16.mxu0 0
    %2432 = vmatpush1.bf16.msra.mxu0 %v2409
    %2433 = vmatprep.subr.bf16.mxu0 0
    %2434 = vmatpush1.bf16.msra.mxu0 %v2410
    %2435 = vmatprep.subr.bf16.mxu0 0
    %2436 = vmatpush1.bf16.msra.mxu0 0
    %2437 = vmatprep.subr.bf16.mxu0 0
    %2438 = vmatpush1.bf16.msra.mxu0 0
    %2439 = vmatprep.subr.bf16.mxu0 0
    %2440 = vmatpush1.bf16.msra.mxu0 0
    %2441 = vmatprep.subr.bf16.mxu0 0
    %2442 = vmatpush1.bf16.msra.mxu0 0
    %2443 = vmatprep.subr.bf16.mxu0 0
    %2444 = vmatpush1.bf16.msra.mxu0 0
    %2445 = vmatprep.subr.bf16.mxu0 0
    %2446 = vmatpush1.bf16.msra.mxu0 0
    %2447 = vmatprep.subr.bf16.mxu0 0
    %2448 = vmatpush1.bf16.msra.mxu0 0
    %2449 = vmatprep.subr.bf16.mxu0 0
    %2450 = vmatpush1.bf16.msra.mxu0 0
    %2451 = vmatprep.mubr.bf16.mxu0 0
    %2452 = vmatmul.mubr.bf16.gmra.mrb[0].mxu0 %v2347
    %v2453 = vpop.f32.mrb[0].mxu0
    %v2454 = vadd.f32 %v2369, %v2453
    %v2455 = vpop.f32.mrb[0].mxu0
    %v2456 = vpop.f32.mrb[0].mxu0
    %v2457 = vadd.f32 %v2369, %v2456
    %v2458 = vpop.f32.mrb[0].mxu0
    %2459 = vdwg.mxu0
    %2460 = vst [vmem:[#allocation11] sm:$0xff] %v2454
    %2461 = vst [vmem:[#allocation11 + $0x8] sm:$0xff] %v2457
    // Predicated region
    $region58: #{tpu_custom_call.1} parent=1 // pred_check
      _
    $region59: #{tpu_custom_call.1} parent=1 // pred_check_branch
      %2463 = sbr.rel (0) target = $region61
    $region60: #{tpu_custom_call.1} parent=1 // pred_region
      %s2465 = ssub.s32 256, 256
      %2466 = vsyncadd [#allocation4], %s2465
      %s2467 = sshll.u32 [#allocation11], 4
      %s2468 = int_to_ptr.vmem [resolvable:$true] %s2467
      %2473 = dma.vmem_to_hbm [thread:$0]  %s2468, 256, %s9, [#allocation4], 128, 128, 8
    $region61: #{tpu_custom_call.1} parent=1 // pred_fallthru
      _
    // Predicated region
    $region62: #{tpu_custom_call.1} parent=1 // pred_check
      _
    $region63: #{tpu_custom_call.1} parent=1 // pred_check_branch
      %2475 = sbr.rel (0) target = $region65
    $region64: #{tpu_custom_call.1} parent=1 // pred_region
      %2476 = dma.done [#allocation4], 256
    $region65: #{tpu_custom_call.1} parent=1 // pred_fallthru
      _
    %2477 = vsyncpa [#allocation3], 1
    %2478 = vsyncpa [#allocation6], 1
    %2479 = vsyncpa [#allocation9], 1
    %2480 = vsyncpa [#allocation4], 1

</llo_original>
